<compile_context>
chip_gen: v7x
topology: tpu7x:2x2x1
jax: 0.10.0
libtpu: 0.0.40
codegen_flags: <defaults>
</compile_context>

<pallas_src>
import functools

import jax
import jax.numpy as jnp
from jax import lax
from jax.experimental import pallas as pl
from jax.experimental.pallas import tpu as pltpu


# ----------------------------------------------------------------------------
# Kernel 1: conv1 (3x3 stride-2, Cin=1) as a single matmul  relu(p1 @ w1 + b1)
# ----------------------------------------------------------------------------
def _conv1_kernel(p_ref, w_ref, b_ref, o_ref):
    acc = jnp.dot(p_ref[...], w_ref[...], preferred_element_type=jnp.float32)
    o_ref[...] = jnp.maximum(acc + b_ref[...], 0.0).astype(o_ref.dtype)


def conv1_matmul(p1_flat, w1, b1, *, out_dtype=jnp.bfloat16):
    """p1_flat: (M, 9) bf16, w1: (9, C) bf16, b1: (1, C) f32 -> (M, C)."""
    M, K = p1_flat.shape
    K2, C = w1.shape
    assert K == K2 and b1.shape == (1, C)
    tm = M if M <= 4096 else 4096            # full-dim block or x8-aligned tile
    return pl.pallas_call(
        _conv1_kernel,
        out_shape=jax.ShapeDtypeStruct((M, C), out_dtype),
        grid=(pl.cdiv(M, tm),),
        in_specs=[
            pl.BlockSpec((tm, K), lambda i: (i, 0)),
            pl.BlockSpec((K, C), lambda i: (0, 0)),
            pl.BlockSpec((1, C), lambda i: (0, 0)),
        ],
        out_specs=pl.BlockSpec((tm, C), lambda i: (i, 0)),
        compiler_params=pltpu.CompilerParams(
            dimension_semantics=("parallel",),
            vmem_limit_bytes=32 * 1024 * 1024,
        ),
    )(p1_flat, w1, b1)


# ----------------------------------------------------------------------------
# Kernel 2: fused conv2 (3x3 stride-2) + bias + ReLU + output Linear.
# ----------------------------------------------------------------------------
def _conv2_linear_kernel(a_ref, w2_ref, b2_ref, wo_ref, bo_ref, o_ref, *,
                         n_f2, fh):
    """a_ref: (1, 6*fh, tt, C) phase planes; plane index = (2*dt + pf)*fh + j.

    For output frequency f2, conv2 tap (dt, df) reads the contiguous slice
    plane(dt, pf=df&1, j=f2+(df==2))[:, :].  The (tt, C) slab is accumulated in
    f32 over the 9 taps, bias+ReLU'd, cast to bf16 and immediately contracted
    with the per-f2 linear weights -- the conv2 activation never leaves VMEM.
    """
    tt = a_ref.shape[2]
    C = a_ref.shape[3]
    N = o_ref.shape[2]
    y = jnp.zeros((tt, N), jnp.float32)
    for f2 in range(n_f2):
        acc = jnp.zeros((tt, C), jnp.float32)
        for dt in range(3):
            for df in range(3):
                pf = df & 1                       # frequency parity of this tap
                j = f2 + (1 if df == 2 else 0)    # index within the parity plane
                lhs = a_ref[0, (2 * dt + pf) * fh + j, :, :]        # (tt, C)
                acc = acc + jnp.dot(lhs, w2_ref[dt * 3 + df],
                                    preferred_element_type=jnp.float32)
        slab = jnp.maximum(acc + b2_ref[...], 0.0).astype(wo_ref.dtype)
        y = y + jnp.dot(slab, wo_ref[f2], preferred_element_type=jnp.float32)
    o_ref[0] = (y + bo_ref[...]).astype(o_ref.dtype)


def conv2_linear_fused(a1p, w2t, b2, woF, bo, *, out_dtype=jnp.float32):
    """a1p: (B, 6*Fh, T2, C) bf16 phase planes -> y: (B, T2, N) f32."""
    B, P, T2, C = a1p.shape
    F2, C2, N = woF.shape
    Fh = F2 + 1
    assert P == 6 * Fh and C2 == C
    assert w2t.shape == (9, C, C) and b2.shape == (1, C) and bo.shape == (1, N)

    # Time-tile: keep the (double-buffered) a1p block around ~2 MiB.
    bytes_per_row = P * C * a1p.dtype.itemsize
    tt_cap = max(8, ((2 * 1024 * 1024) // bytes_per_row) // 8 * 8)
    tt = T2 if T2 <= tt_cap else tt_cap          # full dim or x8 tile (ragged ok)

    est_vmem = (2 * tt * bytes_per_row
                + 2 * w2t.size * w2t.dtype.itemsize
                + 2 * woF.size * woF.dtype.itemsize
                + 2 * tt * N * 4
                + 8 * 1024 * 1024)               # slack for acc/slab values
    vmem_limit = int(min(max(est_vmem, 32 * 1024 * 1024), 56 * 1024 * 1024))

    return pl.pallas_call(
        functools.partial(_conv2_linear_kernel, n_f2=F2, fh=Fh),
        out_shape=jax.ShapeDtypeStruct((B, T2, N), out_dtype),
        grid=(B, pl.cdiv(T2, tt)),
        in_specs=[
            pl.BlockSpec((1, P, tt, C), lambda b, i: (b, 0, i, 0)),
            pl.BlockSpec((9, C, C), lambda b, i: (0, 0, 0)),
            pl.BlockSpec((1, C), lambda b, i: (0, 0)),
            pl.BlockSpec((F2, C, N), lambda b, i: (0, 0, 0)),
            pl.BlockSpec((1, N), lambda b, i: (0, 0)),
        ],
        out_specs=pl.BlockSpec((1, tt, N), lambda b, i: (b, i, 0)),
        compiler_params=pltpu.CompilerParams(
            dimension_semantics=("parallel", "parallel"),
            vmem_limit_bytes=vmem_limit,
        ),
    )(a1p, w2t, b2, woF, bo)


# ----------------------------------------------------------------------------
# JAX glue: conv1 patches directly in the phase-plane layout.
# ----------------------------------------------------------------------------
def _build_conv1_patches(xs, T2, F2):
    """(B, T, idim) -> (B, 6, Fh, T2, 9): plane (2*dt+pf) holds the conv1
    patches for output rows t1 = 2*t2+dt and columns f1 = 2*j+pf, i.e. exactly
    what the fused conv2 kernel consumes (stride-2 taps become contiguous)."""
    Fh = F2 + 1
    planes = []
    for dt in range(3):
        for pf in range(2):
            jmax = Fh if pf == 0 else F2          # last odd column never read
            taps = []
            for i in range(3):                    # conv1 time tap
                for j1 in range(3):               # conv1 freq tap
                    t0 = 2 * dt + i
                    f0 = 2 * pf + j1
                    taps.append(xs[:, t0:t0 + 4 * (T2 - 1) + 1:4,
                                      f0:f0 + 4 * (jmax - 1) + 1:4])  # (B,T2,jmax)
            plane = jnp.stack(taps, axis=-1)                 # (B, T2, jmax, 9)
            plane = jnp.transpose(plane, (0, 2, 1, 3))        # (B, jmax, T2, 9)
            if jmax < Fh:
                plane = jnp.pad(plane, ((0, 0), (0, Fh - jmax), (0, 0), (0, 0)))
            planes.append(plane)
    return jnp.stack(planes, axis=1)                          # (B, 6, Fh, T2, 9)


# ----------------------------------------------------------------------------
# One-time parameter preparation (re-layout + bf16 cast; NO padding needed).
# ----------------------------------------------------------------------------
def prepare_params(params, compute_dtype=jnp.bfloat16):
    odim = params["conv1_b"].shape[0]

    # conv1: (Cout,1,3,3) -> (9, Cout), tap order (kh, kw).
    w1 = jnp.transpose(params["conv1_w"], (2, 3, 1, 0)).reshape(9, odim)
    w1 = w1.astype(compute_dtype)
    b1 = params["conv1_b"].astype(jnp.float32).reshape(1, odim)

    # conv2: (Cout,Cin,3,3) -> per-tap (9, Cin, Cout) matrices.
    w2t = jnp.transpose(params["conv2_w"], (2, 3, 1, 0)).reshape(9, odim, odim)
    w2t = w2t.astype(compute_dtype)
    b2 = params["conv2_b"].astype(jnp.float32).reshape(1, odim)

    # Linear: out_w[n, c*F2 + f] (PyTorch transpose(1,2).view flatten) -> per-f2
    # (F2, C, N) matrices, so the kernel contracts channel-major without any
    # in-kernel transpose/reshape.
    N, Klin = params["out_w"].shape
    F2 = Klin // odim
    woF = jnp.transpose(params["out_w"].reshape(N, odim, F2), (2, 1, 0))
    woF = woF.astype(compute_dtype)                     # (F2, C, N)
    bo = params["out_b"].astype(jnp.float32).reshape(1, N)

    return {"w1": w1, "b1": b1, "w2t": w2t, "b2": b2, "woF": woF, "bo": bo}


# ----------------------------------------------------------------------------
# Subsampling.forward  (subsampling_rate == 4  ->  Conv2dSubsampling4)
# ----------------------------------------------------------------------------
def subsampling_forward(prepared, odim, xs, ilens, masks,
                        compute_dtype=jnp.bfloat16):
    """xs: (B, T, idim) f32; ilens: (B,) i32 (recomputed); masks: (B, 1, T)."""
    del ilens
    B, T, idim = xs.shape
    T1, F1 = (T - 1) // 2, (idim - 1) // 2
    T2, F2 = (T1 - 1) // 2, (F1 - 1) // 2
    assert T2 >= 1 and F2 >= 1, "input too short/narrow for Conv2dSubsampling4"
    Fh = F2 + 1
    C = prepared["w1"].shape[1]
    assert prepared["woF"].shape == (F2, C, odim)

    # conv1 + ReLU, emitted directly in the phase-plane layout (B, 6*Fh, T2, C).
    p1 = _build_conv1_patches(xs.astype(compute_dtype), T2, F2)
    a1p = conv1_matmul(p1.reshape(B * 6 * Fh * T2, 9),
                       prepared["w1"], prepared["b1"], out_dtype=compute_dtype)
    a1p = a1p.reshape(B, 6 * Fh, T2, C)

    # conv2 + ReLU + output Linear, fused (no a2 / im2col HBM round trip).
    y = conv2_linear_fused(a1p, prepared["w2t"], prepared["b2"],
                           prepared["woF"], prepared["bo"],
                           out_dtype=jnp.float32)

    new_masks = masks[:, :, 2::2][:, :, 2::2]
    new_ilens = new_masks.squeeze(1).sum(1).astype(jnp.int32)
    return y, new_ilens, new_masks


# ----------------------------------------------------------------------------
# Pure-JAX reference (same bf16 operand rounding, f32 accumulation)
# ----------------------------------------------------------------------------
def reference_forward(params, xs, masks, compute_dtype=jnp.bfloat16):
    x = xs.astype(compute_dtype)[:, :, :, None]
    w1 = jnp.transpose(params["conv1_w"], (2, 3, 1, 0)).astype(compute_dtype)
    x = lax.conv_general_dilated(x, w1, (2, 2), "VALID",
                                 dimension_numbers=("NHWC", "HWIO", "NHWC"),
                                 preferred_element_type=jnp.float32)
    x = jax.nn.relu(x + params["conv1_b"]).astype(compute_dtype)
    w2 = jnp.transpose(params["conv2_w"], (2, 3, 1, 0)).astype(compute_dtype)
    x = lax.conv_general_dilated(x, w2, (2, 2), "VALID",
                                 dimension_numbers=("NHWC", "HWIO", "NHWC"),
                                 preferred_element_type=jnp.float32)
    x = jax.nn.relu(x + params["conv2_b"]).astype(compute_dtype)
    B, T2, F2, C = x.shape
    x = jnp.transpose(x, (0, 1, 3, 2)).reshape(B, T2, C * F2)
    y = jnp.dot(x, params["out_w"].T.astype(compute_dtype),
                preferred_element_type=jnp.float32) + params["out_b"]
    new_masks = masks[:, :, 2::2][:, :, 2::2]
    return y, new_masks.squeeze(1).sum(1).astype(jnp.int32), new_masks


def init_params(key, idim, odim):
    f_out = ((idim - 1) // 2 - 1) // 2
    k = jax.random.split(key, 6)
    scale = 0.1
    return {
        "conv1_w": scale * jax.random.normal(k[0], (odim, 1, 3, 3), jnp.float32),
        "conv1_b": scale * jax.random.normal(k[1], (odim,), jnp.float32),
        "conv2_w": scale * jax.random.normal(k[2], (odim, odim, 3, 3), jnp.float32),
        "conv2_b": scale * jax.random.normal(k[3], (odim,), jnp.float32),
        "out_w": scale * jax.random.normal(k[4], (odim, odim * f_out), jnp.float32),
        "out_b": scale * jax.random.normal(k[5], (odim,), jnp.float32),
    }


if __name__ == "__main__":
    B, T, idim, odim = 2, 16, 16, 32
    key = jax.random.PRNGKey(0)
    k_x, k_p = jax.random.split(key)

    params = init_params(k_p, idim, odim)
    prepared = prepare_params(params)                 # one-time weight prep

    xs = jax.random.normal(k_x, (B, T, idim), jnp.float32)
    ilens = jnp.array([T, T - 4], dtype=jnp.int32)
    masks = jnp.arange(T)[None, None, :] < ilens[:, None, None]   # (B,1,T) bool

    fwd = jax.jit(functools.partial(subsampling_forward, prepared, odim))
    ys, new_ilens, new_masks = fwd(xs, ilens, masks)
    jax.block_until_ready((ys, new_ilens, new_masks))

    ys_ref, ilens_ref, masks_ref = reference_forward(params, xs, masks)
    assert ys.shape == ys_ref.shape, (ys.shape, ys_ref.shape)
    err = float(jnp.max(jnp.abs(ys - ys_ref)))
    assert jnp.allclose(ys, ys_ref, atol=1e-2, rtol=1e-2), f"max abs err {err}"
    assert jnp.array_equal(new_ilens, ilens_ref)
    assert jnp.array_equal(new_masks, masks_ref)

    print("KERNEL_OK")
</pallas_src>

<mosaic_0001>
module attributes {stable_mosaic.version = 11 : i64} {
  func.func @_conv1_kernel(%arg0: i32, %arg1: memref<144x9xbf16, #tpu.memory_space<vmem>>, %arg2: memref<9x32xbf16, #tpu.memory_space<vmem>>, %arg3: memref<1x32xf32, #tpu.memory_space<vmem>>, %arg4: memref<144x32xbf16, #tpu.memory_space<vmem>>) attributes {dimension_semantics = [#tpu.dimension_semantics<parallel>], iteration_bounds = array<i64: 1>, scalar_prefetch = 0 : i64, scratch_operands = 0 : i64, tpu.core_type = #tpu.core_type<tc>, window_params = [{transform_indices = @transform_0, window_bounds = array<i64: 144, 9>}, {pipeline_mode = #tpu.pipeline_mode<synchronous>, transform_indices = @transform_1, window_bounds = array<i64: 9, 32>}, {pipeline_mode = #tpu.pipeline_mode<synchronous>, transform_indices = @transform_2, window_bounds = array<i64: 1, 32>}, {transform_indices = @transform_3, window_bounds = array<i64: 144, 32>}]} {
    %c0 = arith.constant 0 : index
    %c0_0 = arith.constant 0 : index
    %0 = vector.load %arg1[%c0, %c0_0] : memref<144x9xbf16, #tpu.memory_space<vmem>>, vector<144x9xbf16>
    %c0_1 = arith.constant 0 : index
    %c0_2 = arith.constant 0 : index
    %1 = vector.load %arg2[%c0_1, %c0_2] : memref<9x32xbf16, #tpu.memory_space<vmem>>, vector<9x32xbf16>
    %cst = arith.constant dense<0.000000e+00> : vector<144x32xf32>
    %2 = tpu.matmul %0, %1, %cst {dimension_numbers = #tpu.dot_dimension_numbers<[1], [0], [0], [1], [0, 0, 1, 1], [], []>} : vector<144x9xbf16>, vector<9x32xbf16>, vector<144x32xf32> -> vector<144x32xf32>
    %c0_3 = arith.constant 0 : index
    %c0_4 = arith.constant 0 : index
    %3 = vector.load %arg3[%c0_3, %c0_4] : memref<1x32xf32, #tpu.memory_space<vmem>>, vector<1x32xf32>
    %4 = vector.broadcast %3 : vector<1x32xf32> to vector<144x32xf32>
    %5 = arith.addf %2, %4 : vector<144x32xf32>
    %cst_5 = arith.constant 0.000000e+00 : f32
    %6 = vector.broadcast %cst_5 : f32 to vector<144x32xf32>
    %7 = arith.maximumf %5, %6 : vector<144x32xf32>
    %8 = arith.truncf %7 : vector<144x32xf32> to vector<144x32xbf16>
    %c0_6 = arith.constant 0 : index
    %c0_7 = arith.constant 0 : index
    %9 = vector.load %arg4[%c0_6, %c0_7] : memref<144x32xbf16, #tpu.memory_space<vmem>>, vector<144x32xbf16>
    tpu.vector_store %arg4[%c0_6, %c0_7], %8 {strides = array<i32>} : memref<144x32xbf16, #tpu.memory_space<vmem>>, vector<144x32xbf16>,
    return
  }
  func.func @transform_0(%arg0: i32) -> (i32, i32) {
    %c0_i32 = arith.constant 0 : i32
    %c0_i32_0 = arith.constant 0 : i32
    return %arg0, %c0_i32 : i32, i32
  }
  func.func @transform_1(%arg0: i32) -> (i32, i32) {
    %c0_i32 = arith.constant 0 : i32
    %c0_i32_0 = arith.constant 0 : i32
    %c0_i32_1 = arith.constant 0 : i32
    return %c0_i32, %c0_i32_0 : i32, i32
  }
  func.func @transform_2(%arg0: i32) -> (i32, i32) {
    %c0_i32 = arith.constant 0 : i32
    %c0_i32_0 = arith.constant 0 : i32
    %c0_i32_1 = arith.constant 0 : i32
    return %c0_i32, %c0_i32_0 : i32, i32
  }
  func.func @transform_3(%arg0: i32) -> (i32, i32) {
    %c0_i32 = arith.constant 0 : i32
    %c0_i32_0 = arith.constant 0 : i32
    return %arg0, %c0_i32 : i32, i32
  }
}

module attributes {stable_mosaic.version = 11 : i64} {
  func.func @_conv2_linear_kernel(%arg0: i32, %arg1: i32, %arg2: memref<1x24x3x32xbf16, #tpu.memory_space<vmem>>, %arg3: memref<9x32x32xbf16, #tpu.memory_space<vmem>>, %arg4: memref<1x32xf32, #tpu.memory_space<vmem>>, %arg5: memref<3x32x32xbf16, #tpu.memory_space<vmem>>, %arg6: memref<1x32xf32, #tpu.memory_space<vmem>>, %arg7: memref<1x3x32xf32, #tpu.memory_space<vmem>>) attributes {dimension_semantics = [#tpu.dimension_semantics<parallel>, #tpu.dimension_semantics<parallel>], iteration_bounds = array<i64: 2, 1>, scalar_prefetch = 0 : i64, scratch_operands = 0 : i64, tpu.core_type = #tpu.core_type<tc>, window_params = [{transform_indices = @transform_0, window_bounds = array<i64: 1, 24, 3, 32>}, {pipeline_mode = #tpu.pipeline_mode<synchronous>, transform_indices = @transform_1, window_bounds = array<i64: 9, 32, 32>}, {pipeline_mode = #tpu.pipeline_mode<synchronous>, transform_indices = @transform_2, window_bounds = array<i64: 1, 32>}, {pipeline_mode = #tpu.pipeline_mode<synchronous>, transform_indices = @transform_3, window_bounds = array<i64: 3, 32, 32>}, {pipeline_mode = #tpu.pipeline_mode<synchronous>, transform_indices = @transform_4, window_bounds = array<i64: 1, 32>}, {transform_indices = @transform_5, window_bounds = array<i64: 1, 3, 32>}]} {
    %cst = arith.constant 0.000000e+00 : f32
    %0 = vector.broadcast %cst : f32 to vector<3x32xf32>
    %cst_0 = arith.constant 0.000000e+00 : f32
    %1 = vector.broadcast %cst_0 : f32 to vector<3x32xf32>
    %c0 = arith.constant 0 : index
    %c0_1 = arith.constant 0 : index
    %c0_2 = arith.constant 0 : index
    %c0_3 = arith.constant 0 : index
    %2 = vector.load %arg2[%c0, %c0_1, %c0_2, %c0_3] : memref<1x24x3x32xbf16, #tpu.memory_space<vmem>>, vector<1x1x3x32xbf16>
    %3 = vector.shape_cast %2 : vector<1x1x3x32xbf16> to vector<3x32xbf16>
    %c0_4 = arith.constant 0 : index
    %c0_5 = arith.constant 0 : index
    %c0_6 = arith.constant 0 : index
    %4 = vector.load %arg3[%c0_4, %c0_5, %c0_6] : memref<9x32x32xbf16, #tpu.memory_space<vmem>>, vector<1x32x32xbf16>
    %5 = vector.shape_cast %4 : vector<1x32x32xbf16> to vector<32x32xbf16>
    %cst_7 = arith.constant dense<0.000000e+00> : vector<3x32xf32>
    %6 = tpu.matmul %3, %5, %cst_7 {dimension_numbers = #tpu.dot_dimension_numbers<[1], [0], [0], [1], [0, 0, 1, 1], [], []>} : vector<3x32xbf16>, vector<32x32xbf16>, vector<3x32xf32> -> vector<3x32xf32>
    %7 = arith.addf %1, %6 : vector<3x32xf32>
    %c0_8 = arith.constant 0 : index
    %c4 = arith.constant 4 : index
    %c0_9 = arith.constant 0 : index
    %c0_10 = arith.constant 0 : index
    %8 = vector.load %arg2[%c0_8, %c4, %c0_9, %c0_10] : memref<1x24x3x32xbf16, #tpu.memory_space<vmem>>, vector<1x1x3x32xbf16>
    %9 = vector.shape_cast %8 : vector<1x1x3x32xbf16> to vector<3x32xbf16>
    %c1 = arith.constant 1 : index
    %c0_11 = arith.constant 0 : index
    %c0_12 = arith.constant 0 : index
    %10 = vector.load %arg3[%c1, %c0_11, %c0_12] : memref<9x32x32xbf16, #tpu.memory_space<vmem>>, vector<1x32x32xbf16>
    %11 = vector.shape_cast %10 : vector<1x32x32xbf16> to vector<32x32xbf16>
    %cst_13 = arith.constant dense<0.000000e+00> : vector<3x32xf32>
    %12 = tpu.matmul %9, %11, %cst_13 {dimension_numbers = #tpu.dot_dimension_numbers<[1], [0], [0], [1], [0, 0, 1, 1], [], []>} : vector<3x32xbf16>, vector<32x32xbf16>, vector<3x32xf32> -> vector<3x32xf32>
    %13 = arith.addf %7, %12 : vector<3x32xf32>
    %c0_14 = arith.constant 0 : index
    %c1_15 = arith.constant 1 : index
    %c0_16 = arith.constant 0 : index
    %c0_17 = arith.constant 0 : index
    %14 = vector.load %arg2[%c0_14, %c1_15, %c0_16, %c0_17] : memref<1x24x3x32xbf16, #tpu.memory_space<vmem>>, vector<1x1x3x32xbf16>
    %15 = vector.shape_cast %14 : vector<1x1x3x32xbf16> to vector<3x32xbf16>
    %c2 = arith.constant 2 : index
    %c0_18 = arith.constant 0 : index
    %c0_19 = arith.constant 0 : index
    %16 = vector.load %arg3[%c2, %c0_18, %c0_19] : memref<9x32x32xbf16, #tpu.memory_space<vmem>>, vector<1x32x32xbf16>
    %17 = vector.shape_cast %16 : vector<1x32x32xbf16> to vector<32x32xbf16>
    %cst_20 = arith.constant dense<0.000000e+00> : vector<3x32xf32>
    %18 = tpu.matmul %15, %17, %cst_20 {dimension_numbers = #tpu.dot_dimension_numbers<[1], [0], [0], [1], [0, 0, 1, 1], [], []>} : vector<3x32xbf16>, vector<32x32xbf16>, vector<3x32xf32> -> vector<3x32xf32>
    %19 = arith.addf %13, %18 : vector<3x32xf32>
    %c0_21 = arith.constant 0 : index
    %c8 = arith.constant 8 : index
    %c0_22 = arith.constant 0 : index
    %c0_23 = arith.constant 0 : index
    %20 = vector.load %arg2[%c0_21, %c8, %c0_22, %c0_23] : memref<1x24x3x32xbf16, #tpu.memory_space<vmem>>, vector<1x1x3x32xbf16>
    %21 = vector.shape_cast %20 : vector<1x1x3x32xbf16> to vector<3x32xbf16>
    %c3 = arith.constant 3 : index
    %c0_24 = arith.constant 0 : index
    %c0_25 = arith.constant 0 : index
    %22 = vector.load %arg3[%c3, %c0_24, %c0_25] : memref<9x32x32xbf16, #tpu.memory_space<vmem>>, vector<1x32x32xbf16>
    %23 = vector.shape_cast %22 : vector<1x32x32xbf16> to vector<32x32xbf16>
    %cst_26 = arith.constant dense<0.000000e+00> : vector<3x32xf32>
    %24 = tpu.matmul %21, %23, %cst_26 {dimension_numbers = #tpu.dot_dimension_numbers<[1], [0], [0], [1], [0, 0, 1, 1], [], []>} : vector<3x32xbf16>, vector<32x32xbf16>, vector<3x32xf32> -> vector<3x32xf32>
    %25 = arith.addf %19, %24 : vector<3x32xf32>
    %c0_27 = arith.constant 0 : index
    %c12 = arith.constant 12 : index
    %c0_28 = arith.constant 0 : index
    %c0_29 = arith.constant 0 : index
    %26 = vector.load %arg2[%c0_27, %c12, %c0_28, %c0_29] : memref<1x24x3x32xbf16, #tpu.memory_space<vmem>>, vector<1x1x3x32xbf16>
    %27 = vector.shape_cast %26 : vector<1x1x3x32xbf16> to vector<3x32xbf16>
    %c4_30 = arith.constant 4 : index
    %c0_31 = arith.constant 0 : index
    %c0_32 = arith.constant 0 : index
    %28 = vector.load %arg3[%c4_30, %c0_31, %c0_32] : memref<9x32x32xbf16, #tpu.memory_space<vmem>>, vector<1x32x32xbf16>
    %29 = vector.shape_cast %28 : vector<1x32x32xbf16> to vector<32x32xbf16>
    %cst_33 = arith.constant dense<0.000000e+00> : vector<3x32xf32>
    %30 = tpu.matmul %27, %29, %cst_33 {dimension_numbers = #tpu.dot_dimension_numbers<[1], [0], [0], [1], [0, 0, 1, 1], [], []>} : vector<3x32xbf16>, vector<32x32xbf16>, vector<3x32xf32> -> vector<3x32xf32>
    %31 = arith.addf %25, %30 : vector<3x32xf32>
    %c0_34 = arith.constant 0 : index
    %c9 = arith.constant 9 : index
    %c0_35 = arith.constant 0 : index
    %c0_36 = arith.constant 0 : index
    %32 = vector.load %arg2[%c0_34, %c9, %c0_35, %c0_36] : memref<1x24x3x32xbf16, #tpu.memory_space<vmem>>, vector<1x1x3x32xbf16>
    %33 = vector.shape_cast %32 : vector<1x1x3x32xbf16> to vector<3x32xbf16>
    %c5 = arith.constant 5 : index
    %c0_37 = arith.constant 0 : index
    %c0_38 = arith.constant 0 : index
    %34 = vector.load %arg3[%c5, %c0_37, %c0_38] : memref<9x32x32xbf16, #tpu.memory_space<vmem>>, vector<1x32x32xbf16>
    %35 = vector.shape_cast %34 : vector<1x32x32xbf16> to vector<32x32xbf16>
    %cst_39 = arith.constant dense<0.000000e+00> : vector<3x32xf32>
    %36 = tpu.matmul %33, %35, %cst_39 {dimension_numbers = #tpu.dot_dimension_numbers<[1], [0], [0], [1], [0, 0, 1, 1], [], []>} : vector<3x32xbf16>, vector<32x32xbf16>, vector<3x32xf32> -> vector<3x32xf32>
    %37 = arith.addf %31, %36 : vector<3x32xf32>
    %c0_40 = arith.constant 0 : index
    %c16 = arith.constant 16 : index
    %c0_41 = arith.constant 0 : index
    %c0_42 = arith.constant 0 : index
    %38 = vector.load %arg2[%c0_40, %c16, %c0_41, %c0_42] : memref<1x24x3x32xbf16, #tpu.memory_space<vmem>>, vector<1x1x3x32xbf16>
    %39 = vector.shape_cast %38 : vector<1x1x3x32xbf16> to vector<3x32xbf16>
    %c6 = arith.constant 6 : index
    %c0_43 = arith.constant 0 : index
    %c0_44 = arith.constant 0 : index
    %40 = vector.load %arg3[%c6, %c0_43, %c0_44] : memref<9x32x32xbf16, #tpu.memory_space<vmem>>, vector<1x32x32xbf16>
    %41 = vector.shape_cast %40 : vector<1x32x32xbf16> to vector<32x32xbf16>
    %cst_45 = arith.constant dense<0.000000e+00> : vector<3x32xf32>
    %42 = tpu.matmul %39, %41, %cst_45 {dimension_numbers = #tpu.dot_dimension_numbers<[1], [0], [0], [1], [0, 0, 1, 1], [], []>} : vector<3x32xbf16>, vector<32x32xbf16>, vector<3x32xf32> -> vector<3x32xf32>
    %43 = arith.addf %37, %42 : vector<3x32xf32>
    %c0_46 = arith.constant 0 : index
    %c20 = arith.constant 20 : index
    %c0_47 = arith.constant 0 : index
    %c0_48 = arith.constant 0 : index
    %44 = vector.load %arg2[%c0_46, %c20, %c0_47, %c0_48] : memref<1x24x3x32xbf16, #tpu.memory_space<vmem>>, vector<1x1x3x32xbf16>
    %45 = vector.shape_cast %44 : vector<1x1x3x32xbf16> to vector<3x32xbf16>
    %c7 = arith.constant 7 : index
    %c0_49 = arith.constant 0 : index
    %c0_50 = arith.constant 0 : index
    %46 = vector.load %arg3[%c7, %c0_49, %c0_50] : memref<9x32x32xbf16, #tpu.memory_space<vmem>>, vector<1x32x32xbf16>
    %47 = vector.shape_cast %46 : vector<1x32x32xbf16> to vector<32x32xbf16>
    %cst_51 = arith.constant dense<0.000000e+00> : vector<3x32xf32>
    %48 = tpu.matmul %45, %47, %cst_51 {dimension_numbers = #tpu.dot_dimension_numbers<[1], [0], [0], [1], [0, 0, 1, 1], [], []>} : vector<3x32xbf16>, vector<32x32xbf16>, vector<3x32xf32> -> vector<3x32xf32>
    %49 = arith.addf %43, %48 : vector<3x32xf32>
    %c0_52 = arith.constant 0 : index
    %c17 = arith.constant 17 : index
    %c0_53 = arith.constant 0 : index
    %c0_54 = arith.constant 0 : index
    %50 = vector.load %arg2[%c0_52, %c17, %c0_53, %c0_54] : memref<1x24x3x32xbf16, #tpu.memory_space<vmem>>, vector<1x1x3x32xbf16>
    %51 = vector.shape_cast %50 : vector<1x1x3x32xbf16> to vector<3x32xbf16>
    %c8_55 = arith.constant 8 : index
    %c0_56 = arith.constant 0 : index
    %c0_57 = arith.constant 0 : index
    %52 = vector.load %arg3[%c8_55, %c0_56, %c0_57] : memref<9x32x32xbf16, #tpu.memory_space<vmem>>, vector<1x32x32xbf16>
    %53 = vector.shape_cast %52 : vector<1x32x32xbf16> to vector<32x32xbf16>
    %cst_58 = arith.constant dense<0.000000e+00> : vector<3x32xf32>
    %54 = tpu.matmul %51, %53, %cst_58 {dimension_numbers = #tpu.dot_dimension_numbers<[1], [0], [0], [1], [0, 0, 1, 1], [], []>} : vector<3x32xbf16>, vector<32x32xbf16>, vector<3x32xf32> -> vector<3x32xf32>
    %55 = arith.addf %49, %54 : vector<3x32xf32>
    %c0_59 = arith.constant 0 : index
    %c0_60 = arith.constant 0 : index
    %56 = vector.load %arg4[%c0_59, %c0_60] : memref<1x32xf32, #tpu.memory_space<vmem>>, vector<1x32xf32>
    %57 = vector.broadcast %56 : vector<1x32xf32> to vector<3x32xf32>
    %58 = arith.addf %55, %57 : vector<3x32xf32>
    %cst_61 = arith.constant 0.000000e+00 : f32
    %59 = vector.broadcast %cst_61 : f32 to vector<3x32xf32>
    %60 = arith.maximumf %58, %59 : vector<3x32xf32>
    %61 = arith.truncf %60 : vector<3x32xf32> to vector<3x32xbf16>
    %c0_62 = arith.constant 0 : index
    %c0_63 = arith.constant 0 : index
    %c0_64 = arith.constant 0 : index
    %62 = vector.load %arg5[%c0_62, %c0_63, %c0_64] : memref<3x32x32xbf16, #tpu.memory_space<vmem>>, vector<1x32x32xbf16>
    %63 = vector.shape_cast %62 : vector<1x32x32xbf16> to vector<32x32xbf16>
    %cst_65 = arith.constant dense<0.000000e+00> : vector<3x32xf32>
    %64 = tpu.matmul %61, %63, %cst_65 {dimension_numbers = #tpu.dot_dimension_numbers<[1], [0], [0], [1], [0, 0, 1, 1], [], []>} : vector<3x32xbf16>, vector<32x32xbf16>, vector<3x32xf32> -> vector<3x32xf32>
    %65 = arith.addf %0, %64 : vector<3x32xf32>
    %cst_66 = arith.constant 0.000000e+00 : f32
    %66 = vector.broadcast %cst_66 : f32 to vector<3x32xf32>
    %c0_67 = arith.constant 0 : index
    %c1_68 = arith.constant 1 : index
    %c0_69 = arith.constant 0 : index
    %c0_70 = arith.constant 0 : index
    %67 = vector.load %arg2[%c0_67, %c1_68, %c0_69, %c0_70] : memref<1x24x3x32xbf16, #tpu.memory_space<vmem>>, vector<1x1x3x32xbf16>
    %68 = vector.shape_cast %67 : vector<1x1x3x32xbf16> to vector<3x32xbf16>
    %c0_71 = arith.constant 0 : index
    %c0_72 = arith.constant 0 : index
    %c0_73 = arith.constant 0 : index
    %69 = vector.load %arg3[%c0_71, %c0_72, %c0_73] : memref<9x32x32xbf16, #tpu.memory_space<vmem>>, vector<1x32x32xbf16>
    %70 = vector.shape_cast %69 : vector<1x32x32xbf16> to vector<32x32xbf16>
    %cst_74 = arith.constant dense<0.000000e+00> : vector<3x32xf32>
    %71 = tpu.matmul %68, %70, %cst_74 {dimension_numbers = #tpu.dot_dimension_numbers<[1], [0], [0], [1], [0, 0, 1, 1], [], []>} : vector<3x32xbf16>, vector<32x32xbf16>, vector<3x32xf32> -> vector<3x32xf32>
    %72 = arith.addf %66, %71 : vector<3x32xf32>
    %c0_75 = arith.constant 0 : index
    %c5_76 = arith.constant 5 : index
    %c0_77 = arith.constant 0 : index
    %c0_78 = arith.constant 0 : index
    %73 = vector.load %arg2[%c0_75, %c5_76, %c0_77, %c0_78] : memref<1x24x3x32xbf16, #tpu.memory_space<vmem>>, vector<1x1x3x32xbf16>
    %74 = vector.shape_cast %73 : vector<1x1x3x32xbf16> to vector<3x32xbf16>
    %c1_79 = arith.constant 1 : index
    %c0_80 = arith.constant 0 : index
    %c0_81 = arith.constant 0 : index
    %75 = vector.load %arg3[%c1_79, %c0_80, %c0_81] : memref<9x32x32xbf16, #tpu.memory_space<vmem>>, vector<1x32x32xbf16>
    %76 = vector.shape_cast %75 : vector<1x32x32xbf16> to vector<32x32xbf16>
    %cst_82 = arith.constant dense<0.000000e+00> : vector<3x32xf32>
    %77 = tpu.matmul %74, %76, %cst_82 {dimension_numbers = #tpu.dot_dimension_numbers<[1], [0], [0], [1], [0, 0, 1, 1], [], []>} : vector<3x32xbf16>, vector<32x32xbf16>, vector<3x32xf32> -> vector<3x32xf32>
    %78 = arith.addf %72, %77 : vector<3x32xf32>
    %c0_83 = arith.constant 0 : index
    %c2_84 = arith.constant 2 : index
    %c0_85 = arith.constant 0 : index
    %c0_86 = arith.constant 0 : index
    %79 = vector.load %arg2[%c0_83, %c2_84, %c0_85, %c0_86] : memref<1x24x3x32xbf16, #tpu.memory_space<vmem>>, vector<1x1x3x32xbf16>
    %80 = vector.shape_cast %79 : vector<1x1x3x32xbf16> to vector<3x32xbf16>
    %c2_87 = arith.constant 2 : index
    %c0_88 = arith.constant 0 : index
    %c0_89 = arith.constant 0 : index
    %81 = vector.load %arg3[%c2_87, %c0_88, %c0_89] : memref<9x32x32xbf16, #tpu.memory_space<vmem>>, vector<1x32x32xbf16>
    %82 = vector.shape_cast %81 : vector<1x32x32xbf16> to vector<32x32xbf16>
    %cst_90 = arith.constant dense<0.000000e+00> : vector<3x32xf32>
    %83 = tpu.matmul %80, %82, %cst_90 {dimension_numbers = #tpu.dot_dimension_numbers<[1], [0], [0], [1], [0, 0, 1, 1], [], []>} : vector<3x32xbf16>, vector<32x32xbf16>, vector<3x32xf32> -> vector<3x32xf32>
    %84 = arith.addf %78, %83 : vector<3x32xf32>
    %c0_91 = arith.constant 0 : index
    %c9_92 = arith.constant 9 : index
    %c0_93 = arith.constant 0 : index
    %c0_94 = arith.constant 0 : index
    %85 = vector.load %arg2[%c0_91, %c9_92, %c0_93, %c0_94] : memref<1x24x3x32xbf16, #tpu.memory_space<vmem>>, vector<1x1x3x32xbf16>
    %86 = vector.shape_cast %85 : vector<1x1x3x32xbf16> to vector<3x32xbf16>
    %c3_95 = arith.constant 3 : index
    %c0_96 = arith.constant 0 : index
    %c0_97 = arith.constant 0 : index
    %87 = vector.load %arg3[%c3_95, %c0_96, %c0_97] : memref<9x32x32xbf16, #tpu.memory_space<vmem>>, vector<1x32x32xbf16>
    %88 = vector.shape_cast %87 : vector<1x32x32xbf16> to vector<32x32xbf16>
    %cst_98 = arith.constant dense<0.000000e+00> : vector<3x32xf32>
    %89 = tpu.matmul %86, %88, %cst_98 {dimension_numbers = #tpu.dot_dimension_numbers<[1], [0], [0], [1], [0, 0, 1, 1], [], []>} : vector<3x32xbf16>, vector<32x32xbf16>, vector<3x32xf32> -> vector<3x32xf32>
    %90 = arith.addf %84, %89 : vector<3x32xf32>
    %c0_99 = arith.constant 0 : index
    %c13 = arith.constant 13 : index
    %c0_100 = arith.constant 0 : index
    %c0_101 = arith.constant 0 : index
    %91 = vector.load %arg2[%c0_99, %c13, %c0_100, %c0_101] : memref<1x24x3x32xbf16, #tpu.memory_space<vmem>>, vector<1x1x3x32xbf16>
    %92 = vector.shape_cast %91 : vector<1x1x3x32xbf16> to vector<3x32xbf16>
    %c4_102 = arith.constant 4 : index
    %c0_103 = arith.constant 0 : index
    %c0_104 = arith.constant 0 : index
    %93 = vector.load %arg3[%c4_102, %c0_103, %c0_104] : memref<9x32x32xbf16, #tpu.memory_space<vmem>>, vector<1x32x32xbf16>
    %94 = vector.shape_cast %93 : vector<1x32x32xbf16> to vector<32x32xbf16>
    %cst_105 = arith.constant dense<0.000000e+00> : vector<3x32xf32>
    %95 = tpu.matmul %92, %94, %cst_105 {dimension_numbers = #tpu.dot_dimension_numbers<[1], [0], [0], [1], [0, 0, 1, 1], [], []>} : vector<3x32xbf16>, vector<32x32xbf16>, vector<3x32xf32> -> vector<3x32xf32>
    %96 = arith.addf %90, %95 : vector<3x32xf32>
    %c0_106 = arith.constant 0 : index
    %c10 = arith.constant 10 : index
    %c0_107 = arith.constant 0 : index
    %c0_108 = arith.constant 0 : index
    %97 = vector.load %arg2[%c0_106, %c10, %c0_107, %c0_108] : memref<1x24x3x32xbf16, #tpu.memory_space<vmem>>, vector<1x1x3x32xbf16>
    %98 = vector.shape_cast %97 : vector<1x1x3x32xbf16> to vector<3x32xbf16>
    %c5_109 = arith.constant 5 : index
    %c0_110 = arith.constant 0 : index
    %c0_111 = arith.constant 0 : index
    %99 = vector.load %arg3[%c5_109, %c0_110, %c0_111] : memref<9x32x32xbf16, #tpu.memory_space<vmem>>, vector<1x32x32xbf16>
    %100 = vector.shape_cast %99 : vector<1x32x32xbf16> to vector<32x32xbf16>
    %cst_112 = arith.constant dense<0.000000e+00> : vector<3x32xf32>
    %101 = tpu.matmul %98, %100, %cst_112 {dimension_numbers = #tpu.dot_dimension_numbers<[1], [0], [0], [1], [0, 0, 1, 1], [], []>} : vector<3x32xbf16>, vector<32x32xbf16>, vector<3x32xf32> -> vector<3x32xf32>
    %102 = arith.addf %96, %101 : vector<3x32xf32>
    %c0_113 = arith.constant 0 : index
    %c17_114 = arith.constant 17 : index
    %c0_115 = arith.constant 0 : index
    %c0_116 = arith.constant 0 : index
    %103 = vector.load %arg2[%c0_113, %c17_114, %c0_115, %c0_116] : memref<1x24x3x32xbf16, #tpu.memory_space<vmem>>, vector<1x1x3x32xbf16>
    %104 = vector.shape_cast %103 : vector<1x1x3x32xbf16> to vector<3x32xbf16>
    %c6_117 = arith.constant 6 : index
    %c0_118 = arith.constant 0 : index
    %c0_119 = arith.constant 0 : index
    %105 = vector.load %arg3[%c6_117, %c0_118, %c0_119] : memref<9x32x32xbf16, #tpu.memory_space<vmem>>, vector<1x32x32xbf16>
    %106 = vector.shape_cast %105 : vector<1x32x32xbf16> to vector<32x32xbf16>
    %cst_120 = arith.constant dense<0.000000e+00> : vector<3x32xf32>
    %107 = tpu.matmul %104, %106, %cst_120 {dimension_numbers = #tpu.dot_dimension_numbers<[1], [0], [0], [1], [0, 0, 1, 1], [], []>} : vector<3x32xbf16>, vector<32x32xbf16>, vector<3x32xf32> -> vector<3x32xf32>
    %108 = arith.addf %102, %107 : vector<3x32xf32>
    %c0_121 = arith.constant 0 : index
    %c21 = arith.constant 21 : index
    %c0_122 = arith.constant 0 : index
    %c0_123 = arith.constant 0 : index
    %109 = vector.load %arg2[%c0_121, %c21, %c0_122, %c0_123] : memref<1x24x3x32xbf16, #tpu.memory_space<vmem>>, vector<1x1x3x32xbf16>
    %110 = vector.shape_cast %109 : vector<1x1x3x32xbf16> to vector<3x32xbf16>
    %c7_124 = arith.constant 7 : index
    %c0_125 = arith.constant 0 : index
    %c0_126 = arith.constant 0 : index
    %111 = vector.load %arg3[%c7_124, %c0_125, %c0_126] : memref<9x32x32xbf16, #tpu.memory_space<vmem>>, vector<1x32x32xbf16>
    %112 = vector.shape_cast %111 : vector<1x32x32xbf16> to vector<32x32xbf16>
    %cst_127 = arith.constant dense<0.000000e+00> : vector<3x32xf32>
    %113 = tpu.matmul %110, %112, %cst_127 {dimension_numbers = #tpu.dot_dimension_numbers<[1], [0], [0], [1], [0, 0, 1, 1], [], []>} : vector<3x32xbf16>, vector<32x32xbf16>, vector<3x32xf32> -> vector<3x32xf32>
    %114 = arith.addf %108, %113 : vector<3x32xf32>
    %c0_128 = arith.constant 0 : index
    %c18 = arith.constant 18 : index
    %c0_129 = arith.constant 0 : index
    %c0_130 = arith.constant 0 : index
    %115 = vector.load %arg2[%c0_128, %c18, %c0_129, %c0_130] : memref<1x24x3x32xbf16, #tpu.memory_space<vmem>>, vector<1x1x3x32xbf16>
    %116 = vector.shape_cast %115 : vector<1x1x3x32xbf16> to vector<3x32xbf16>
    %c8_131 = arith.constant 8 : index
    %c0_132 = arith.constant 0 : index
    %c0_133 = arith.constant 0 : index
    %117 = vector.load %arg3[%c8_131, %c0_132, %c0_133] : memref<9x32x32xbf16, #tpu.memory_space<vmem>>, vector<1x32x32xbf16>
    %118 = vector.shape_cast %117 : vector<1x32x32xbf16> to vector<32x32xbf16>
    %cst_134 = arith.constant dense<0.000000e+00> : vector<3x32xf32>
    %119 = tpu.matmul %116, %118, %cst_134 {dimension_numbers = #tpu.dot_dimension_numbers<[1], [0], [0], [1], [0, 0, 1, 1], [], []>} : vector<3x32xbf16>, vector<32x32xbf16>, vector<3x32xf32> -> vector<3x32xf32>
    %120 = arith.addf %114, %119 : vector<3x32xf32>
    %c0_135 = arith.constant 0 : index
    %c0_136 = arith.constant 0 : index
    %121 = vector.load %arg4[%c0_135, %c0_136] : memref<1x32xf32, #tpu.memory_space<vmem>>, vector<1x32xf32>
    %122 = vector.broadcast %121 : vector<1x32xf32> to vector<3x32xf32>
    %123 = arith.addf %120, %122 : vector<3x32xf32>
    %cst_137 = arith.constant 0.000000e+00 : f32
    %124 = vector.broadcast %cst_137 : f32 to vector<3x32xf32>
    %125 = arith.maximumf %123, %124 : vector<3x32xf32>
    %126 = arith.truncf %125 : vector<3x32xf32> to vector<3x32xbf16>
    %c1_138 = arith.constant 1 : index
    %c0_139 = arith.constant 0 : index
    %c0_140 = arith.constant 0 : index
    %127 = vector.load %arg5[%c1_138, %c0_139, %c0_140] : memref<3x32x32xbf16, #tpu.memory_space<vmem>>, vector<1x32x32xbf16>
    %128 = vector.shape_cast %127 : vector<1x32x32xbf16> to vector<32x32xbf16>
    %cst_141 = arith.constant dense<0.000000e+00> : vector<3x32xf32>
    %129 = tpu.matmul %126, %128, %cst_141 {dimension_numbers = #tpu.dot_dimension_numbers<[1], [0], [0], [1], [0, 0, 1, 1], [], []>} : vector<3x32xbf16>, vector<32x32xbf16>, vector<3x32xf32> -> vector<3x32xf32>
    %130 = arith.addf %65, %129 : vector<3x32xf32>
    %cst_142 = arith.constant 0.000000e+00 : f32
    %131 = vector.broadcast %cst_142 : f32 to vector<3x32xf32>
    %c0_143 = arith.constant 0 : index
    %c2_144 = arith.constant 2 : index
    %c0_145 = arith.constant 0 : index
    %c0_146 = arith.constant 0 : index
    %132 = vector.load %arg2[%c0_143, %c2_144, %c0_145, %c0_146] : memref<1x24x3x32xbf16, #tpu.memory_space<vmem>>, vector<1x1x3x32xbf16>
    %133 = vector.shape_cast %132 : vector<1x1x3x32xbf16> to vector<3x32xbf16>
    %c0_147 = arith.constant 0 : index
    %c0_148 = arith.constant 0 : index
    %c0_149 = arith.constant 0 : index
    %134 = vector.load %arg3[%c0_147, %c0_148, %c0_149] : memref<9x32x32xbf16, #tpu.memory_space<vmem>>, vector<1x32x32xbf16>
    %135 = vector.shape_cast %134 : vector<1x32x32xbf16> to vector<32x32xbf16>
    %cst_150 = arith.constant dense<0.000000e+00> : vector<3x32xf32>
    %136 = tpu.matmul %133, %135, %cst_150 {dimension_numbers = #tpu.dot_dimension_numbers<[1], [0], [0], [1], [0, 0, 1, 1], [], []>} : vector<3x32xbf16>, vector<32x32xbf16>, vector<3x32xf32> -> vector<3x32xf32>
    %137 = arith.addf %131, %136 : vector<3x32xf32>
    %c0_151 = arith.constant 0 : index
    %c6_152 = arith.constant 6 : index
    %c0_153 = arith.constant 0 : index
    %c0_154 = arith.constant 0 : index
    %138 = vector.load %arg2[%c0_151, %c6_152, %c0_153, %c0_154] : memref<1x24x3x32xbf16, #tpu.memory_space<vmem>>, vector<1x1x3x32xbf16>
    %139 = vector.shape_cast %138 : vector<1x1x3x32xbf16> to vector<3x32xbf16>
    %c1_155 = arith.constant 1 : index
    %c0_156 = arith.constant 0 : index
    %c0_157 = arith.constant 0 : index
    %140 = vector.load %arg3[%c1_155, %c0_156, %c0_157] : memref<9x32x32xbf16, #tpu.memory_space<vmem>>, vector<1x32x32xbf16>
    %141 = vector.shape_cast %140 : vector<1x32x32xbf16> to vector<32x32xbf16>
    %cst_158 = arith.constant dense<0.000000e+00> : vector<3x32xf32>
    %142 = tpu.matmul %139, %141, %cst_158 {dimension_numbers = #tpu.dot_dimension_numbers<[1], [0], [0], [1], [0, 0, 1, 1], [], []>} : vector<3x32xbf16>, vector<32x32xbf16>, vector<3x32xf32> -> vector<3x32xf32>
    %143 = arith.addf %137, %142 : vector<3x32xf32>
    %c0_159 = arith.constant 0 : index
    %c3_160 = arith.constant 3 : index
    %c0_161 = arith.constant 0 : index
    %c0_162 = arith.constant 0 : index
    %144 = vector.load %arg2[%c0_159, %c3_160, %c0_161, %c0_162] : memref<1x24x3x32xbf16, #tpu.memory_space<vmem>>, vector<1x1x3x32xbf16>
    %145 = vector.shape_cast %144 : vector<1x1x3x32xbf16> to vector<3x32xbf16>
    %c2_163 = arith.constant 2 : index
    %c0_164 = arith.constant 0 : index
    %c0_165 = arith.constant 0 : index
    %146 = vector.load %arg3[%c2_163, %c0_164, %c0_165] : memref<9x32x32xbf16, #tpu.memory_space<vmem>>, vector<1x32x32xbf16>
    %147 = vector.shape_cast %146 : vector<1x32x32xbf16> to vector<32x32xbf16>
    %cst_166 = arith.constant dense<0.000000e+00> : vector<3x32xf32>
    %148 = tpu.matmul %145, %147, %cst_166 {dimension_numbers = #tpu.dot_dimension_numbers<[1], [0], [0], [1], [0, 0, 1, 1], [], []>} : vector<3x32xbf16>, vector<32x32xbf16>, vector<3x32xf32> -> vector<3x32xf32>
    %149 = arith.addf %143, %148 : vector<3x32xf32>
    %c0_167 = arith.constant 0 : index
    %c10_168 = arith.constant 10 : index
    %c0_169 = arith.constant 0 : index
    %c0_170 = arith.constant 0 : index
    %150 = vector.load %arg2[%c0_167, %c10_168, %c0_169, %c0_170] : memref<1x24x3x32xbf16, #tpu.memory_space<vmem>>, vector<1x1x3x32xbf16>
    %151 = vector.shape_cast %150 : vector<1x1x3x32xbf16> to vector<3x32xbf16>
    %c3_171 = arith.constant 3 : index
    %c0_172 = arith.constant 0 : index
    %c0_173 = arith.constant 0 : index
    %152 = vector.load %arg3[%c3_171, %c0_172, %c0_173] : memref<9x32x32xbf16, #tpu.memory_space<vmem>>, vector<1x32x32xbf16>
    %153 = vector.shape_cast %152 : vector<1x32x32xbf16> to vector<32x32xbf16>
    %cst_174 = arith.constant dense<0.000000e+00> : vector<3x32xf32>
    %154 = tpu.matmul %151, %153, %cst_174 {dimension_numbers = #tpu.dot_dimension_numbers<[1], [0], [0], [1], [0, 0, 1, 1], [], []>} : vector<3x32xbf16>, vector<32x32xbf16>, vector<3x32xf32> -> vector<3x32xf32>
    %155 = arith.addf %149, %154 : vector<3x32xf32>
    %c0_175 = arith.constant 0 : index
    %c14 = arith.constant 14 : index
    %c0_176 = arith.constant 0 : index
    %c0_177 = arith.constant 0 : index
    %156 = vector.load %arg2[%c0_175, %c14, %c0_176, %c0_177] : memref<1x24x3x32xbf16, #tpu.memory_space<vmem>>, vector<1x1x3x32xbf16>
    %157 = vector.shape_cast %156 : vector<1x1x3x32xbf16> to vector<3x32xbf16>
    %c4_178 = arith.constant 4 : index
    %c0_179 = arith.constant 0 : index
    %c0_180 = arith.constant 0 : index
    %158 = vector.load %arg3[%c4_178, %c0_179, %c0_180] : memref<9x32x32xbf16, #tpu.memory_space<vmem>>, vector<1x32x32xbf16>
    %159 = vector.shape_cast %158 : vector<1x32x32xbf16> to vector<32x32xbf16>
    %cst_181 = arith.constant dense<0.000000e+00> : vector<3x32xf32>
    %160 = tpu.matmul %157, %159, %cst_181 {dimension_numbers = #tpu.dot_dimension_numbers<[1], [0], [0], [1], [0, 0, 1, 1], [], []>} : vector<3x32xbf16>, vector<32x32xbf16>, vector<3x32xf32> -> vector<3x32xf32>
    %161 = arith.addf %155, %160 : vector<3x32xf32>
    %c0_182 = arith.constant 0 : index
    %c11 = arith.constant 11 : index
    %c0_183 = arith.constant 0 : index
    %c0_184 = arith.constant 0 : index
    %162 = vector.load %arg2[%c0_182, %c11, %c0_183, %c0_184] : memref<1x24x3x32xbf16, #tpu.memory_space<vmem>>, vector<1x1x3x32xbf16>
    %163 = vector.shape_cast %162 : vector<1x1x3x32xbf16> to vector<3x32xbf16>
    %c5_185 = arith.constant 5 : index
    %c0_186 = arith.constant 0 : index
    %c0_187 = arith.constant 0 : index
    %164 = vector.load %arg3[%c5_185, %c0_186, %c0_187] : memref<9x32x32xbf16, #tpu.memory_space<vmem>>, vector<1x32x32xbf16>
    %165 = vector.shape_cast %164 : vector<1x32x32xbf16> to vector<32x32xbf16>
    %cst_188 = arith.constant dense<0.000000e+00> : vector<3x32xf32>
    %166 = tpu.matmul %163, %165, %cst_188 {dimension_numbers = #tpu.dot_dimension_numbers<[1], [0], [0], [1], [0, 0, 1, 1], [], []>} : vector<3x32xbf16>, vector<32x32xbf16>, vector<3x32xf32> -> vector<3x32xf32>
    %167 = arith.addf %161, %166 : vector<3x32xf32>
    %c0_189 = arith.constant 0 : index
    %c18_190 = arith.constant 18 : index
    %c0_191 = arith.constant 0 : index
    %c0_192 = arith.constant 0 : index
    %168 = vector.load %arg2[%c0_189, %c18_190, %c0_191, %c0_192] : memref<1x24x3x32xbf16, #tpu.memory_space<vmem>>, vector<1x1x3x32xbf16>
    %169 = vector.shape_cast %168 : vector<1x1x3x32xbf16> to vector<3x32xbf16>
    %c6_193 = arith.constant 6 : index
    %c0_194 = arith.constant 0 : index
    %c0_195 = arith.constant 0 : index
    %170 = vector.load %arg3[%c6_193, %c0_194, %c0_195] : memref<9x32x32xbf16, #tpu.memory_space<vmem>>, vector<1x32x32xbf16>
    %171 = vector.shape_cast %170 : vector<1x32x32xbf16> to vector<32x32xbf16>
    %cst_196 = arith.constant dense<0.000000e+00> : vector<3x32xf32>
    %172 = tpu.matmul %169, %171, %cst_196 {dimension_numbers = #tpu.dot_dimension_numbers<[1], [0], [0], [1], [0, 0, 1, 1], [], []>} : vector<3x32xbf16>, vector<32x32xbf16>, vector<3x32xf32> -> vector<3x32xf32>
    %173 = arith.addf %167, %172 : vector<3x32xf32>
    %c0_197 = arith.constant 0 : index
    %c22 = arith.constant 22 : index
    %c0_198 = arith.constant 0 : index
    %c0_199 = arith.constant 0 : index
    %174 = vector.load %arg2[%c0_197, %c22, %c0_198, %c0_199] : memref<1x24x3x32xbf16, #tpu.memory_space<vmem>>, vector<1x1x3x32xbf16>
    %175 = vector.shape_cast %174 : vector<1x1x3x32xbf16> to vector<3x32xbf16>
    %c7_200 = arith.constant 7 : index
    %c0_201 = arith.constant 0 : index
    %c0_202 = arith.constant 0 : index
    %176 = vector.load %arg3[%c7_200, %c0_201, %c0_202] : memref<9x32x32xbf16, #tpu.memory_space<vmem>>, vector<1x32x32xbf16>
    %177 = vector.shape_cast %176 : vector<1x32x32xbf16> to vector<32x32xbf16>
    %cst_203 = arith.constant dense<0.000000e+00> : vector<3x32xf32>
    %178 = tpu.matmul %175, %177, %cst_203 {dimension_numbers = #tpu.dot_dimension_numbers<[1], [0], [0], [1], [0, 0, 1, 1], [], []>} : vector<3x32xbf16>, vector<32x32xbf16>, vector<3x32xf32> -> vector<3x32xf32>
    %179 = arith.addf %173, %178 : vector<3x32xf32>
    %c0_204 = arith.constant 0 : index
    %c19 = arith.constant 19 : index
    %c0_205 = arith.constant 0 : index
    %c0_206 = arith.constant 0 : index
    %180 = vector.load %arg2[%c0_204, %c19, %c0_205, %c0_206] : memref<1x24x3x32xbf16, #tpu.memory_space<vmem>>, vector<1x1x3x32xbf16>
    %181 = vector.shape_cast %180 : vector<1x1x3x32xbf16> to vector<3x32xbf16>
    %c8_207 = arith.constant 8 : index
    %c0_208 = arith.constant 0 : index
    %c0_209 = arith.constant 0 : index
    %182 = vector.load %arg3[%c8_207, %c0_208, %c0_209] : memref<9x32x32xbf16, #tpu.memory_space<vmem>>, vector<1x32x32xbf16>
    %183 = vector.shape_cast %182 : vector<1x32x32xbf16> to vector<32x32xbf16>
    %cst_210 = arith.constant dense<0.000000e+00> : vector<3x32xf32>
    %184 = tpu.matmul %181, %183, %cst_210 {dimension_numbers = #tpu.dot_dimension_numbers<[1], [0], [0], [1], [0, 0, 1, 1], [], []>} : vector<3x32xbf16>, vector<32x32xbf16>, vector<3x32xf32> -> vector<3x32xf32>
    %185 = arith.addf %179, %184 : vector<3x32xf32>
    %c0_211 = arith.constant 0 : index
    %c0_212 = arith.constant 0 : index
    %186 = vector.load %arg4[%c0_211, %c0_212] : memref<1x32xf32, #tpu.memory_space<vmem>>, vector<1x32xf32>
    %187 = vector.broadcast %186 : vector<1x32xf32> to vector<3x32xf32>
    %188 = arith.addf %185, %187 : vector<3x32xf32>
    %cst_213 = arith.constant 0.000000e+00 : f32
    %189 = vector.broadcast %cst_213 : f32 to vector<3x32xf32>
    %190 = arith.maximumf %188, %189 : vector<3x32xf32>
    %191 = arith.truncf %190 : vector<3x32xf32> to vector<3x32xbf16>
    %c2_214 = arith.constant 2 : index
    %c0_215 = arith.constant 0 : index
    %c0_216 = arith.constant 0 : index
    %192 = vector.load %arg5[%c2_214, %c0_215, %c0_216] : memref<3x32x32xbf16, #tpu.memory_space<vmem>>, vector<1x32x32xbf16>
    %193 = vector.shape_cast %192 : vector<1x32x32xbf16> to vector<32x32xbf16>
    %cst_217 = arith.constant dense<0.000000e+00> : vector<3x32xf32>
    %194 = tpu.matmul %191, %193, %cst_217 {dimension_numbers = #tpu.dot_dimension_numbers<[1], [0], [0], [1], [0, 0, 1, 1], [], []>} : vector<3x32xbf16>, vector<32x32xbf16>, vector<3x32xf32> -> vector<3x32xf32>
    %195 = arith.addf %130, %194 : vector<3x32xf32>
    %c0_218 = arith.constant 0 : index
    %c0_219 = arith.constant 0 : index
    %196 = vector.load %arg6[%c0_218, %c0_219] : memref<1x32xf32, #tpu.memory_space<vmem>>, vector<1x32xf32>
    %197 = vector.broadcast %196 : vector<1x32xf32> to vector<3x32xf32>
    %198 = arith.addf %195, %197 : vector<3x32xf32>
    %c0_220 = arith.constant 0 : index
    %c0_221 = arith.constant 0 : index
    %c0_222 = arith.constant 0 : index
    %199 = vector.load %arg7[%c0_220, %c0_221, %c0_222] : memref<1x3x32xf32, #tpu.memory_space<vmem>>, vector<1x3x32xf32>
    %200 = vector.shape_cast %199 : vector<1x3x32xf32> to vector<3x32xf32>
    %201 = vector.shape_cast %198 : vector<3x32xf32> to vector<1x3x32xf32>
    tpu.vector_store %arg7[%c0_220, %c0_221, %c0_222], %201 {strides = array<i32>} : memref<1x3x32xf32, #tpu.memory_space<vmem>>, vector<1x3x32xf32>,
    return
  }
  func.func @transform_0(%arg0: i32, %arg1: i32) -> (i32, i32, i32, i32) {
    %c0_i32 = arith.constant 0 : i32
    %c0_i32_0 = arith.constant 0 : i32
    %c0_i32_1 = arith.constant 0 : i32
    return %arg0, %c0_i32, %arg1, %c0_i32_0 : i32, i32, i32, i32
  }
  func.func @transform_1(%arg0: i32, %arg1: i32) -> (i32, i32, i32) {
    %c0_i32 = arith.constant 0 : i32
    %c0_i32_0 = arith.constant 0 : i32
    %c0_i32_1 = arith.constant 0 : i32
    %c0_i32_2 = arith.constant 0 : i32
    return %c0_i32, %c0_i32_0, %c0_i32_1 : i32, i32, i32
  }
  func.func @transform_2(%arg0: i32, %arg1: i32) -> (i32, i32) {
    %c0_i32 = arith.constant 0 : i32
    %c0_i32_0 = arith.constant 0 : i32
    %c0_i32_1 = arith.constant 0 : i32
    return %c0_i32, %c0_i32_0 : i32, i32
  }
  func.func @transform_3(%arg0: i32, %arg1: i32) -> (i32, i32, i32) {
    %c0_i32 = arith.constant 0 : i32
    %c0_i32_0 = arith.constant 0 : i32
    %c0_i32_1 = arith.constant 0 : i32
    %c0_i32_2 = arith.constant 0 : i32
    return %c0_i32, %c0_i32_0, %c0_i32_1 : i32, i32, i32
  }
  func.func @transform_4(%arg0: i32, %arg1: i32) -> (i32, i32) {
    %c0_i32 = arith.constant 0 : i32
    %c0_i32_0 = arith.constant 0 : i32
    %c0_i32_1 = arith.constant 0 : i32
    return %c0_i32, %c0_i32_0 : i32, i32
  }
  func.func @transform_5(%arg0: i32, %arg1: i32) -> (i32, i32, i32) {
    %c0_i32 = arith.constant 0 : i32
    %c0_i32_0 = arith.constant 0 : i32
    return %arg0, %arg1, %c0_i32 : i32, i32, i32
  }
}

</mosaic_0001>

<llo_original>
// kernel: subsampling_forward.2
$region0: #{subsampling_forward.2}
  #allocation0 [shape = 'u32[]', space=smem, size = 0x4, offset = 0x4, fixed_abs, tag = 'smem constant byte address 0x4 - core index']
  #allocation1 [shape = 'u32[144,128]{1,0:T(1,128)}', space=vmem, size = 0x12000, scoped, tag = 'internal scratch']
  %s0 = inlined_call_operand.vmem [shape: bf16[144,9], index: 0, kind: input, shape index: {}]
  %s1 = inlined_call_operand.vmem [shape: bf16[9,32], index: 1, kind: input, shape index: {}]
  %s2 = inlined_call_operand.vmem [shape: f32[1,32], index: 2, kind: input, shape index: {}]
  %s3 = inlined_call_operand.vmem [shape: bf16[144,32], index: 3, kind: output, shape index: {}]
  %s4 = sld [smem:[#allocation0]]
  $region22: #{subsampling_forward.2} parent=0
    _
  %s6 = ssub.s32 1, %s4
  %s7 = scalar_select 0, %s6, %s4
  // Predicated region
  $region2: #{subsampling_forward.2} parent=0 // pred_check
    _
  $region3: #{subsampling_forward.2} parent=0 // pred_check_branch
    %9 = sbr.rel (0) target = $region5
  $region4: #{subsampling_forward.2} parent=0 // pred_region
    _
  $region5: #{subsampling_forward.2} parent=0 // pred_fallthru
    _
  // Predicated region
  $region6: #{subsampling_forward.2} parent=0 // pred_check
    _
  $region7: #{subsampling_forward.2} parent=0 // pred_check_branch
    %11 = sbr.rel (0) target = $region9
  $region8: #{subsampling_forward.2} parent=0 // pred_region
    _
  $region9: #{subsampling_forward.2} parent=0 // pred_fallthru
    _
  // Predicated region
  $region10: #{subsampling_forward.2} parent=0 // pred_check
    _
  $region11: #{subsampling_forward.2} parent=0 // pred_check_branch
    %13 = sbr.rel (0) target = $region13
  $region12: #{subsampling_forward.2} parent=0 // pred_region
    _
  $region13: #{subsampling_forward.2} parent=0 // pred_fallthru
    _
  %v15 = vld [vmem:[%s0] sm:$0xf]
  %v16 = vld [vmem:[%s0 + $0x4] sm:$0xf]
  %v17 = vld [vmem:[%s0 + $0x8] sm:$0xf]
  %v18 = vld [vmem:[%s0 + $0xc] sm:$0xf]
  %v19 = vld [vmem:[%s0 + $0x10] sm:$0xf]
  %v20 = vld [vmem:[%s0 + $0x14] sm:$0xf]
  %v21 = vld [vmem:[%s0 + $0x18] sm:$0xf]
  %v22 = vld [vmem:[%s0 + $0x1c] sm:$0xf]
  %v23 = vld [vmem:[%s0 + $0x20] sm:$0xf]
  %v24 = vld [vmem:[%s0 + $0x24] sm:$0xf]
  %v25 = vld [vmem:[%s0 + $0x28] sm:$0xf]
  %v26 = vld [vmem:[%s0 + $0x2c] sm:$0xf]
  %v27 = vld [vmem:[%s0 + $0x30] sm:$0xf]
  %v28 = vld [vmem:[%s0 + $0x34] sm:$0xf]
  %v29 = vld [vmem:[%s0 + $0x38] sm:$0xf]
  %v30 = vld [vmem:[%s0 + $0x3c] sm:$0xf]
  %v31 = vld [vmem:[%s0 + $0x40] sm:$0xf]
  %v32 = vld [vmem:[%s0 + $0x44] sm:$0xf]
  %v33 = vld [vmem:[%s1] sm:$0xf]
  %v34 = vld [vmem:[%s1 + $0x4] sm:$0x1]
  %v35 = vld [vmem:[%s2] sm:$0x1]
  %v37 = vlaneseq
  %v38 = vshrl.u32 %v37, 7
  %v39 = vsub.s32 0, %v38
  %v40 = vrot.slane %v35, %v39
  %v60 = vunpack.c.l.b16 %v15
  %v61 = vunpack.c.l.b16 %v16
  %v62 = vunpack.c.l.b16 %v17
  %v63 = vunpack.c.l.b16 %v18
  %v64 = vunpack.c.l.b16 %v19
  %v65 = vunpack.c.l.b16 %v20
  %v66 = vunpack.c.l.b16 %v21
  %v67 = vunpack.c.l.b16 %v22
  %v68 = vunpack.c.l.b16 %v23
  %v69 = vunpack.c.l.b16 %v24
  %v70 = vunpack.c.l.b16 %v25
  %v71 = vunpack.c.l.b16 %v26
  %v72 = vunpack.c.l.b16 %v27
  %v73 = vunpack.c.l.b16 %v28
  %v74 = vunpack.c.l.b16 %v29
  %v75 = vunpack.c.l.b16 %v30
  %v76 = vunpack.c.l.b16 %v31
  %v77 = vunpack.c.l.b16 %v32
  %v78 = vpack.c.b16 %v61, %v60
  %v79 = vpack.c.b16 %v63, %v62
  %v80 = vpack.c.b16 %v65, %v64
  %v81 = vpack.c.b16 %v67, %v66
  %v82 = vpack.c.b16 %v69, %v68
  %v83 = vpack.c.b16 %v71, %v70
  %v84 = vpack.c.b16 %v73, %v72
  %v85 = vpack.c.b16 %v75, %v74
  %v86 = vpack.c.b16 %v77, %v76
  %v89 = vunpack.c.l.b16 %v33
  %v90 = vunpack.c.l.b16 %v34
  %v91 = vpack.c.b16 %v90, %v89
  %vm92 = vcmask 72704
  %v94 = vsel %vm92, %v78, 0
  %v97 = vsel %vm92, %v79, 0
  %v100 = vsel %vm92, %v80, 0
  %v103 = vsel %vm92, %v81, 0
  %v106 = vsel %vm92, %v82, 0
  %v109 = vsel %vm92, %v83, 0
  %v112 = vsel %vm92, %v84, 0
  %v115 = vsel %vm92, %v85, 0
  %v118 = vsel %vm92, %v86, 0
  %vm120 = vcmask 1043456
  %vm121 = vcmask 1044480
  %v122 = vsel %vm120, 4294967295, 65535
  %v123 = vsel %vm121, %v122, 0
  %v125 = vand.u32 %v91, %v123
  %127 = vmatprep.subr.bf16.mxu0 0
  %128 = vmatpush1.bf16.msra.mxu0 %v125
  %129 = vmatprep.subr.bf16.mxu0 0
  %130 = vmatpush1.bf16.msra.mxu0 0
  %131 = vmatprep.subr.bf16.mxu0 0
  %132 = vmatpush1.bf16.msra.mxu0 0
  %133 = vmatprep.subr.bf16.mxu0 0
  %134 = vmatpush1.bf16.msra.mxu0 0
  %135 = vmatprep.subr.bf16.mxu0 0
  %136 = vmatpush1.bf16.msra.mxu0 0
  %137 = vmatprep.subr.bf16.mxu0 0
  %138 = vmatpush1.bf16.msra.mxu0 0
  %139 = vmatprep.subr.bf16.mxu0 0
  %140 = vmatpush1.bf16.msra.mxu0 0
  %141 = vmatprep.subr.bf16.mxu0 0
  %142 = vmatpush1.bf16.msra.mxu0 0
  %143 = vmatprep.subr.bf16.mxu0 0
  %144 = vmatpush1.bf16.msra.mxu0 0
  %145 = vmatprep.subr.bf16.mxu0 0
  %146 = vmatpush1.bf16.msra.mxu0 0
  %147 = vmatprep.subr.bf16.mxu0 0
  %148 = vmatpush1.bf16.msra.mxu0 0
  %149 = vmatprep.subr.bf16.mxu0 0
  %150 = vmatpush1.bf16.msra.mxu0 0
  %151 = vmatprep.subr.bf16.mxu0 0
  %152 = vmatpush1.bf16.msra.mxu0 0
  %153 = vmatprep.subr.bf16.mxu0 0
  %154 = vmatpush1.bf16.msra.mxu0 0
  %155 = vmatprep.subr.bf16.mxu0 0
  %156 = vmatpush1.bf16.msra.mxu0 0
  %157 = vmatprep.subr.bf16.mxu0 0
  %158 = vmatpush1.bf16.msra.mxu0 0
  %159 = vmatprep.mubr.bf16.mxu0 0
  %160 = vmatmul.mubr.bf16.gmra.mrb[0].mxu0 %v94
  %v161 = vpop.f32.mrb[0].mxu0
  %v162 = vadd.f32 %v40, %v161
  %v163 = vpop.f32.mrb[0].mxu0
  %v164 = vpop.f32.mrb[0].mxu0
  %v165 = vadd.f32 %v40, %v164
  %v166 = vpop.f32.mrb[0].mxu0
  %167 = vmatprep.mubr.bf16.mxu0 0
  %168 = vmatmul.mubr.bf16.gmra.mrb[0].mxu0 %v97
  %v169 = vpop.f32.mrb[0].mxu0
  %v170 = vadd.f32 %v40, %v169
  %v171 = vpop.f32.mrb[0].mxu0
  %v172 = vpop.f32.mrb[0].mxu0
  %v173 = vadd.f32 %v40, %v172
  %v174 = vpop.f32.mrb[0].mxu0
  %175 = vmatprep.mubr.bf16.mxu0 0
  %176 = vmatmul.mubr.bf16.gmra.mrb[0].mxu0 %v100
  %v177 = vpop.f32.mrb[0].mxu0
  %v178 = vadd.f32 %v40, %v177
  %v179 = vpop.f32.mrb[0].mxu0
  %v180 = vpop.f32.mrb[0].mxu0
  %v181 = vadd.f32 %v40, %v180
  %v182 = vpop.f32.mrb[0].mxu0
  %183 = vmatprep.mubr.bf16.mxu0 0
  %184 = vmatmul.mubr.bf16.gmra.mrb[0].mxu0 %v103
  %v185 = vpop.f32.mrb[0].mxu0
  %v186 = vadd.f32 %v40, %v185
  %v187 = vpop.f32.mrb[0].mxu0
  %v188 = vpop.f32.mrb[0].mxu0
  %v189 = vadd.f32 %v40, %v188
  %v190 = vpop.f32.mrb[0].mxu0
  %191 = vmatprep.mubr.bf16.mxu0 0
  %192 = vmatmul.mubr.bf16.gmra.mrb[0].mxu0 %v106
  %v193 = vpop.f32.mrb[0].mxu0
  %v194 = vadd.f32 %v40, %v193
  %v195 = vpop.f32.mrb[0].mxu0
  %v196 = vpop.f32.mrb[0].mxu0
  %v197 = vadd.f32 %v40, %v196
  %v198 = vpop.f32.mrb[0].mxu0
  %199 = vmatprep.mubr.bf16.mxu0 0
  %200 = vmatmul.mubr.bf16.gmra.mrb[0].mxu0 %v109
  %v201 = vpop.f32.mrb[0].mxu0
  %v202 = vadd.f32 %v40, %v201
  %v203 = vpop.f32.mrb[0].mxu0
  %v204 = vpop.f32.mrb[0].mxu0
  %v205 = vadd.f32 %v40, %v204
  %v206 = vpop.f32.mrb[0].mxu0
  %207 = vmatprep.mubr.bf16.mxu0 0
  %208 = vmatmul.mubr.bf16.gmra.mrb[0].mxu0 %v112
  %v209 = vpop.f32.mrb[0].mxu0
  %v210 = vadd.f32 %v40, %v209
  %v211 = vpop.f32.mrb[0].mxu0
  %v212 = vpop.f32.mrb[0].mxu0
  %v213 = vadd.f32 %v40, %v212
  %v214 = vpop.f32.mrb[0].mxu0
  %215 = vmatprep.mubr.bf16.mxu0 0
  %216 = vmatmul.mubr.bf16.gmra.mrb[0].mxu0 %v115
  %v217 = vpop.f32.mrb[0].mxu0
  %v218 = vadd.f32 %v40, %v217
  %v219 = vpop.f32.mrb[0].mxu0
  %v220 = vpop.f32.mrb[0].mxu0
  %v221 = vadd.f32 %v40, %v220
  %v222 = vpop.f32.mrb[0].mxu0
  %223 = vmatprep.mubr.bf16.mxu0 0
  %224 = vmatmul.mubr.bf16.gmra.mrb[0].mxu0 %v118
  %v225 = vpop.f32.mrb[0].mxu0
  %v226 = vadd.f32 %v40, %v225
  %v227 = vpop.f32.mrb[0].mxu0
  %v228 = vpop.f32.mrb[0].mxu0
  %v229 = vadd.f32 %v40, %v228
  %v230 = vpop.f32.mrb[0].mxu0
  %231 = vdwg.mxu0
  %v232 = vmax.f32 %v162, 0.0
  %v233 = vmax.f32 %v165, 0.0
  %v234 = vmax.f32 %v170, 0.0
  %v235 = vmax.f32 %v173, 0.0
  %v236 = vmax.f32 %v178, 0.0
  %v237 = vmax.f32 %v181, 0.0
  %v238 = vmax.f32 %v186, 0.0
  %v239 = vmax.f32 %v189, 0.0
  %v240 = vmax.f32 %v194, 0.0
  %v241 = vmax.f32 %v197, 0.0
  %v242 = vmax.f32 %v202, 0.0
  %v243 = vmax.f32 %v205, 0.0
  %v244 = vmax.f32 %v210, 0.0
  %v245 = vmax.f32 %v213, 0.0
  %v246 = vmax.f32 %v218, 0.0
  %v247 = vmax.f32 %v221, 0.0
  %v248 = vmax.f32 %v226, 0.0
  %v249 = vmax.f32 %v229, 0.0
  %v250 = vpack.c.bf16 %v233, %v232
  %v251 = vpack.c.bf16 %v235, %v234
  %v252 = vpack.c.bf16 %v237, %v236
  %v253 = vpack.c.bf16 %v239, %v238
  %v254 = vpack.c.bf16 %v241, %v240
  %v255 = vpack.c.bf16 %v243, %v242
  %v256 = vpack.c.bf16 %v245, %v244
  %v257 = vpack.c.bf16 %v247, %v246
  %v258 = vpack.c.bf16 %v249, %v248
  %v268 = vunpack.c.l.b16 %v250
  %v269 = vunpack.c.h.b16 %v250
  %v270 = vunpack.c.l.b16 %v251
  %v271 = vunpack.c.h.b16 %v251
  %v272 = vunpack.c.l.b16 %v252
  %v273 = vunpack.c.h.b16 %v252
  %v274 = vunpack.c.l.b16 %v253
  %v275 = vunpack.c.h.b16 %v253
  %v276 = vunpack.c.l.b16 %v254
  %v277 = vunpack.c.h.b16 %v254
  %v278 = vunpack.c.l.b16 %v255
  %v279 = vunpack.c.h.b16 %v255
  %v280 = vunpack.c.l.b16 %v256
  %v281 = vunpack.c.h.b16 %v256
  %v282 = vunpack.c.l.b16 %v257
  %v283 = vunpack.c.h.b16 %v257
  %v284 = vunpack.c.l.b16 %v258
  %v285 = vunpack.c.h.b16 %v258
  %v286 = vpack.c.b16 %v268, %v268
  %v287 = vpack.c.b16 %v269, %v269
  %v288 = vpack.c.b16 %v270, %v270
  %v289 = vpack.c.b16 %v271, %v271
  %v290 = vpack.c.b16 %v272, %v272
  %v291 = vpack.c.b16 %v273, %v273
  %v292 = vpack.c.b16 %v274, %v274
  %v293 = vpack.c.b16 %v275, %v275
  %v294 = vpack.c.b16 %v276, %v276
  %v295 = vpack.c.b16 %v277, %v277
  %v296 = vpack.c.b16 %v278, %v278
  %v297 = vpack.c.b16 %v279, %v279
  %v298 = vpack.c.b16 %v280, %v280
  %v299 = vpack.c.b16 %v281, %v281
  %v300 = vpack.c.b16 %v282, %v282
  %v301 = vpack.c.b16 %v283, %v283
  %v302 = vpack.c.b16 %v284, %v284
  %v303 = vpack.c.b16 %v285, %v285
  %vm322 = vcmask 257024
  %323 = vst.msk [vmem:[%s3] sm:$0xf] %vm322, %v286
  %324 = vst.msk [vmem:[%s3 + $0x4] sm:$0xf] %vm322, %v287
  %325 = vst.msk [vmem:[%s3 + $0x8] sm:$0xf] %vm322, %v288
  %326 = vst.msk [vmem:[%s3 + $0xc] sm:$0xf] %vm322, %v289
  %327 = vst.msk [vmem:[%s3 + $0x10] sm:$0xf] %vm322, %v290
  %328 = vst.msk [vmem:[%s3 + $0x14] sm:$0xf] %vm322, %v291
  %329 = vst.msk [vmem:[%s3 + $0x18] sm:$0xf] %vm322, %v292
  %330 = vst.msk [vmem:[%s3 + $0x1c] sm:$0xf] %vm322, %v293
  %331 = vst.msk [vmem:[%s3 + $0x20] sm:$0xf] %vm322, %v294
  %332 = vst.msk [vmem:[%s3 + $0x24] sm:$0xf] %vm322, %v295
  %333 = vst.msk [vmem:[%s3 + $0x28] sm:$0xf] %vm322, %v296
  %334 = vst.msk [vmem:[%s3 + $0x2c] sm:$0xf] %vm322, %v297
  %335 = vst.msk [vmem:[%s3 + $0x30] sm:$0xf] %vm322, %v298
  %336 = vst.msk [vmem:[%s3 + $0x34] sm:$0xf] %vm322, %v299
  %337 = vst.msk [vmem:[%s3 + $0x38] sm:$0xf] %vm322, %v300
  %338 = vst.msk [vmem:[%s3 + $0x3c] sm:$0xf] %vm322, %v301
  %339 = vst.msk [vmem:[%s3 + $0x40] sm:$0xf] %vm322, %v302
  %340 = vst.msk [vmem:[%s3 + $0x44] sm:$0xf] %vm322, %v303
  // Predicated region
  $region14: #{subsampling_forward.2} parent=0 // pred_check
    _
  $region15: #{subsampling_forward.2} parent=0 // pred_check_branch
    %342 = sbr.rel (0) target = $region17
  $region16: #{subsampling_forward.2} parent=0 // pred_region
    _
  $region17: #{subsampling_forward.2} parent=0 // pred_fallthru
    _
  // Predicated region
  $region18: #{subsampling_forward.2} parent=0 // pred_check
    _
  $region19: #{subsampling_forward.2} parent=0 // pred_check_branch
    %344 = sbr.rel (0) target = $region21
  $region20: #{subsampling_forward.2} parent=0 // pred_region
    _
  $region21: #{subsampling_forward.2} parent=0 // pred_fallthru
    _

// kernel: subsampling_forward.3
$region0: #{subsampling_forward.3}
  #allocation0 [shape = 'u32[]', space=smem, size = 0x4, offset = 0x4, fixed_abs, tag = 'smem constant byte address 0x4 - core index']
  #allocation1 [shape = 'u32[144,128]{1,0:T(1,128)}', space=vmem, size = 0x12000, scoped, tag = 'internal scratch']
  %s0 = inlined_call_operand.vmem [shape: bf16[2,24,3,32], index: 0, kind: input, shape index: {}]
  %s1 = inlined_call_operand.vmem [shape: bf16[9,32,32], index: 1, kind: input, shape index: {}]
  %s2 = inlined_call_operand.vmem [shape: f32[1,32], index: 2, kind: input, shape index: {}]
  %s3 = inlined_call_operand.vmem [shape: bf16[3,32,32], index: 3, kind: input, shape index: {}]
  %s4 = inlined_call_operand.vmem [shape: f32[1,32], index: 4, kind: input, shape index: {}]
  %s5 = inlined_call_operand.vmem [shape: f32[2,3,32], index: 5, kind: output, shape index: {}]
  %s6 = sld [smem:[#allocation0]]
  $region53: #{subsampling_forward.3} parent=0
    _
  %s8 = ssub.s32 1, %s6
  %s9 = scalar_select 0, %s8, %s6
  loop: start=0, step=1, limit=4
  $region2: #{subsampling_forward.3} parent=0 // loop_pre_header
    _
  $region3: #{subsampling_forward.3} parent=0 // loop_header
    %s11 = sphi 0, %s15
    %p12 = scmp.ge.s32.totalorder %s11, 4
    %s18 = sphi 0, %s30
    %s19 = sphi 0, %s26
    %s20 = sphi 0, %s18
    %s21 = sphi 0, %s19
    %s22 = sphi 0, %s20
    %s23 = sphi 0, %s21
    %s35 = sphi 0, %s37
    %s38 = sphi 0, %s35
    %s39 = sphi 0, %s38
    %s55 = sphi 0, %s39
    %s59 = sphi 0, %s59
    %s61 = sphi 0, %s59
    %s62 = sphi 0, %s61
    %s76 = sphi 0, %s62
    %s80 = sphi 0, %s80
    %s82 = sphi 0, %s80
    %s83 = sphi 0, %s82
    %s97 = sphi 0, %s83
    %s101 = sphi 0, %s101
    %s103 = sphi 0, %s101
    %s104 = sphi 0, %s103
    %s118 = sphi 0, %s104
    %s122 = sphi 0, %s122
    %s124 = sphi 0, %s122
    %s125 = sphi 0, %s124
    %s139 = sphi 0, %s125
    %s147 = sphi 0, %s149
    %s150 = sphi 0, %s147
    %s151 = sphi 0, %s150
    %s167 = sphi 0, %s151
  $region4: #{subsampling_forward.3} parent=0 // loop_header_branch
    %14 = sbr.rel (%p12) target = $region8
  $region5: #{subsampling_forward.3} parent=0 // loop_body
    %s16 = ssub.s32 %s11, 1
    %s17 = ssub.s32 %s11, 2
    %s24 = sadd.s32 1, %s19
    %p25 = scmp.ge.s32.totalorder %s24, 1
    %s26 = scalar_select %p25, 0, %s24
    %s27 = sadd.s32 1, %s18
    %s28 = scalar_select %p25, %s27, %s18
    %p29 = scmp.ge.s32.totalorder %s28, 2
    %s30 = scalar_select %p29, 0, %s28
    %s31 = ssub.s32 %s18, %s30
    %s32 = ssub.s32 %s19, %s26
    %s33 = sor.u32 %s31, %s32
    %p34 = scmp.eq.s32.totalorder %s33, 0
    %s36 = sadd.s32 %s35, 1
    %s37 = scalar_select %p34, %s35, %s36
    %p40 = pneg %p34
    %p41 = scmp.eq.s32.totalorder %s11, 1
    %p42 = por %p40, %p41
    %p43 = scmp.ne.s32.totalorder %s35, %s38
    %p44 = scmp.eq.s32.totalorder %s11, 0
    %p45 = por %p43, %p44
    %p46 = scmp.ne.s32.totalorder %s35, %s38
    %p47 = scmp.eq.s32.totalorder %s16, 1
    %p48 = por %p46, %p47
    %p49 = scmp.ne.s32.totalorder %s38, %s39
    %p50 = scmp.eq.s32.totalorder %s16, 0
    %p51 = por %p49, %p50
    %p52 = scmp.ne.s32.totalorder %s38, %s39
    %p53 = scmp.eq.s32.totalorder %s17, 1
    %p54 = por %p52, %p53
    %p56 = scmp.ne.s32.totalorder %s39, %s55
    %p57 = scmp.eq.s32.totalorder %s17, 0
    %p58 = por %p56, %p57
    %s60 = sadd.s32 %s59, 1
    %p63 = scmp.eq.s32.totalorder %s11, 1
    %p64 = scmp.ne.s32.totalorder %s59, %s61
    %p65 = scmp.eq.s32.totalorder %s11, 0
    %p66 = por %p64, %p65
    %p67 = scmp.ne.s32.totalorder %s59, %s61
    %p68 = scmp.eq.s32.totalorder %s16, 1
    %p69 = por %p67, %p68
    %p70 = scmp.ne.s32.totalorder %s61, %s62
    %p71 = scmp.eq.s32.totalorder %s16, 0
    %p72 = por %p70, %p71
    %p73 = scmp.ne.s32.totalorder %s61, %s62
    %p74 = scmp.eq.s32.totalorder %s17, 1
    %p75 = por %p73, %p74
    %p77 = scmp.ne.s32.totalorder %s62, %s76
    %p78 = scmp.eq.s32.totalorder %s17, 0
    %p79 = por %p77, %p78
    %s81 = sadd.s32 %s80, 1
    %p84 = scmp.eq.s32.totalorder %s11, 1
    %p85 = scmp.ne.s32.totalorder %s80, %s82
    %p86 = scmp.eq.s32.totalorder %s11, 0
    %p87 = por %p85, %p86
    %p88 = scmp.ne.s32.totalorder %s80, %s82
    %p89 = scmp.eq.s32.totalorder %s16, 1
    %p90 = por %p88, %p89
    %p91 = scmp.ne.s32.totalorder %s82, %s83
    %p92 = scmp.eq.s32.totalorder %s16, 0
    %p93 = por %p91, %p92
    %p94 = scmp.ne.s32.totalorder %s82, %s83
    %p95 = scmp.eq.s32.totalorder %s17, 1
    %p96 = por %p94, %p95
    %p98 = scmp.ne.s32.totalorder %s83, %s97
    %p99 = scmp.eq.s32.totalorder %s17, 0
    %p100 = por %p98, %p99
    %s102 = sadd.s32 %s101, 1
    %p105 = scmp.eq.s32.totalorder %s11, 1
    %p106 = scmp.ne.s32.totalorder %s101, %s103
    %p107 = scmp.eq.s32.totalorder %s11, 0
    %p108 = por %p106, %p107
    %p109 = scmp.ne.s32.totalorder %s101, %s103
    %p110 = scmp.eq.s32.totalorder %s16, 1
    %p111 = por %p109, %p110
    %p112 = scmp.ne.s32.totalorder %s103, %s104
    %p113 = scmp.eq.s32.totalorder %s16, 0
    %p114 = por %p112, %p113
    %p115 = scmp.ne.s32.totalorder %s103, %s104
    %p116 = scmp.eq.s32.totalorder %s17, 1
    %p117 = por %p115, %p116
    %p119 = scmp.ne.s32.totalorder %s104, %s118
    %p120 = scmp.eq.s32.totalorder %s17, 0
    %p121 = por %p119, %p120
    %s123 = sadd.s32 %s122, 1
    %p126 = scmp.eq.s32.totalorder %s11, 1
    %p127 = scmp.ne.s32.totalorder %s122, %s124
    %p128 = scmp.eq.s32.totalorder %s11, 0
    %p129 = por %p127, %p128
    %p130 = scmp.ne.s32.totalorder %s122, %s124
    %p131 = scmp.eq.s32.totalorder %s16, 1
    %p132 = por %p130, %p131
    %p133 = scmp.ne.s32.totalorder %s124, %s125
    %p134 = scmp.eq.s32.totalorder %s16, 0
    %p135 = por %p133, %p134
    %p136 = scmp.ne.s32.totalorder %s124, %s125
    %p137 = scmp.eq.s32.totalorder %s17, 1
    %p138 = por %p136, %p137
    %p140 = scmp.ne.s32.totalorder %s125, %s139
    %p141 = scmp.eq.s32.totalorder %s17, 0
    %p142 = por %p140, %p141
    %s143 = ssub.s32 %s18, %s30
    %s144 = ssub.s32 %s19, %s26
    %s145 = sor.u32 %s143, %s144
    %p146 = scmp.eq.s32.totalorder %s145, 0
    %s148 = sadd.s32 %s147, 1
    %s149 = scalar_select %p146, %s147, %s148
    %p152 = pneg %p146
    %p153 = scmp.eq.s32.totalorder %s11, 1
    %p154 = por %p152, %p153
    %p155 = scmp.ne.s32.totalorder %s147, %s150
    %p156 = scmp.eq.s32.totalorder %s11, 0
    %p157 = por %p155, %p156
    %p158 = scmp.ne.s32.totalorder %s147, %s150
    %p159 = scmp.eq.s32.totalorder %s16, 1
    %p160 = por %p158, %p159
    %p161 = scmp.ne.s32.totalorder %s150, %s151
    %p162 = scmp.eq.s32.totalorder %s16, 0
    %p163 = por %p161, %p162
    %p164 = scmp.ne.s32.totalorder %s150, %s151
    %p165 = scmp.eq.s32.totalorder %s17, 1
    %p166 = por %p164, %p165
    %p168 = scmp.ne.s32.totalorder %s151, %s167
    %p169 = scmp.eq.s32.totalorder %s17, 0
    %p170 = por %p168, %p169
    %p171 = scmp.le.s32.totalorder 1, %s11
    %p172 = scmp.lt.s32.totalorder %s11, 3
    %p173 = pnand %p171, %p172
    %p174 = pneg %p173
    // Predicated region
    $region9: #{subsampling_forward.3} parent=5 // pred_check
      _
    $region10: #{subsampling_forward.3} parent=5 // pred_check_branch
      %176 = sbr.rel (%p173) target = $region12
    $region11: #{subsampling_forward.3} parent=5 // pred_region
      %s177 = ssub.s32 %s11, 1
      // Predicated region
      $region13: #{subsampling_forward.3} parent=11 // pred_check
        %p178 = pneg %p72
      $region14: #{subsampling_forward.3} parent=11 // pred_check_branch
        %180 = sbr.rel (%p178) target = $region16
      $region15: #{subsampling_forward.3} parent=11 // pred_region
        _
      $region16: #{subsampling_forward.3} parent=11 // pred_fallthru
        _
      // Predicated region
      $region17: #{subsampling_forward.3} parent=11 // pred_check
        %p181 = pneg %p93
      $region18: #{subsampling_forward.3} parent=11 // pred_check_branch
        %183 = sbr.rel (%p181) target = $region20
      $region19: #{subsampling_forward.3} parent=11 // pred_region
        _
      $region20: #{subsampling_forward.3} parent=11 // pred_fallthru
        _
      // Predicated region
      $region21: #{subsampling_forward.3} parent=11 // pred_check
        %p184 = pneg %p114
      $region22: #{subsampling_forward.3} parent=11 // pred_check_branch
        %186 = sbr.rel (%p184) target = $region24
      $region23: #{subsampling_forward.3} parent=11 // pred_region
        _
      $region24: #{subsampling_forward.3} parent=11 // pred_fallthru
        _
      // Predicated region
      $region25: #{subsampling_forward.3} parent=11 // pred_check
        %p187 = pneg %p135
      $region26: #{subsampling_forward.3} parent=11 // pred_check_branch
        %189 = sbr.rel (%p187) target = $region28
      $region27: #{subsampling_forward.3} parent=11 // pred_region
        _
      $region28: #{subsampling_forward.3} parent=11 // pred_fallthru
        _
    $region12: #{subsampling_forward.3} parent=5 // pred_fallthru
      _
    %p190 = scmp.lt.s32.totalorder %s11, 2
    // Predicated region
    $region29: #{subsampling_forward.3} parent=5 // pred_check
      %p191 = pneg %p190
    $region30: #{subsampling_forward.3} parent=5 // pred_check_branch
      %193 = sbr.rel (%p191) target = $region32
    $region31: #{subsampling_forward.3} parent=5 // pred_region
      // Predicated region
      $region33: #{subsampling_forward.3} parent=31 // pred_check
        %p194 = pneg %p45
      $region34: #{subsampling_forward.3} parent=31 // pred_check_branch
        %196 = sbr.rel (%p194) target = $region36
      $region35: #{subsampling_forward.3} parent=31 // pred_region
        %p197 = scmp.lt.s32.totalorder %s18, 1
        %s198 = scalar_select %p197, %s18, 1
        %p199 = scmp.lt.s32.totalorder %s19, 0
        %s200 = scalar_select %p199, %s19, 0
        %s201 = smul.addr %s198, 24
        %s202 = sadd.s32 %s200, %s201
        %s203 = smul.addr %s202, 2
        %s204 = scalar_lea.vmem %s0, %s203
      $region36: #{subsampling_forward.3} parent=31 // pred_fallthru
        _
    $region32: #{subsampling_forward.3} parent=5 // pred_fallthru
      _
    %p205 = scmp.le.s32.totalorder 1, %s11
    %p206 = scmp.lt.s32.totalorder %s11, 3
    %p207 = pnand %p205, %p206
    %p208 = pneg %p207
    // Predicated region
    $region37: #{subsampling_forward.3} parent=5 // pred_check
      _
    $region38: #{subsampling_forward.3} parent=5 // pred_check_branch
      %210 = sbr.rel (%p207) target = $region40
    $region39: #{subsampling_forward.3} parent=5 // pred_region
      %s211 = ssub.s32 %s11, 1
      %p212 = scmp.lt.s32.totalorder %s20, 1
      %s213 = scalar_select %p212, %s20, 1
      %p214 = scmp.lt.s32.totalorder %s21, 0
      %s215 = scalar_select %p214, %s21, 0
      %s216 = smul.addr %s213, 24
      %s217 = sadd.s32 %s215, %s216
      %s218 = smul.addr %s217, 2
      %s219 = scalar_lea.vmem %s0, %s218
      %p220 = pneg %p51
      %p221 = pneg %p48
      %p222 = pneg %p72
      %p223 = pneg %p69
      %p224 = pneg %p93
      %p225 = pneg %p90
      %p226 = pneg %p114
      %p227 = pneg %p111
      %p228 = pneg %p135
      %p229 = pneg %p132
      %p230 = pneg %p163
      %p231 = pneg %p160
      %p232 = scmp.lt.s32.totalorder %s20, 1
      %s233 = scalar_select %p232, %s20, 1
      %p234 = scmp.lt.s32.totalorder %s21, 0
      %s235 = scalar_select %p234, %s21, 0
      %s236 = sadd.s32 %s235, %s233
      %s237 = smul.addr %s236, 4
      %s238 = scalar_lea.vmem %s5, %s237
      %p239 = scmp.lt.s32.totalorder %s20, 1
      %s240 = scalar_select %p239, %s20, 1
      %p241 = scmp.lt.s32.totalorder %s21, 0
      %s242 = scalar_select %p241, %s21, 0
      %s243 = smul.addr %s240, 24
      %s244 = sadd.s32 %s242, %s243
      %s245 = smul.addr %s244, 2
      %s246 = scalar_lea.vmem %s0, %s245
      %p247 = scmp.lt.s32.totalorder %s20, 1
      %s248 = scalar_select %p247, %s20, 1
      %p249 = scmp.lt.s32.totalorder %s21, 0
      %s250 = scalar_select %p249, %s21, 0
      %s251 = sadd.s32 %s250, %s248
      %s252 = smul.addr %s251, 4
      %s253 = scalar_lea.vmem %s5, %s252
      %v255 = vld [vmem:[%s246] sm:$0x3]
      %v256 = vld [vmem:[%s1] sm:$0xf]
      %v257 = vld [vmem:[%s1 + $0x4] sm:$0xf]
      %v258 = vld [vmem:[%s1 + $0x8] sm:$0xf]
      %v259 = vld [vmem:[%s1 + $0xc] sm:$0xf]
      %s260 = scalar_lea.vmem %s246, 8
      %v261 = vld [vmem:[%s260] sm:$0x3]
      %s262 = scalar_lea.vmem %s1, 16
      %v263 = vld [vmem:[%s262] sm:$0xf]
      %v264 = vld [vmem:[%s262 + $0x4] sm:$0xf]
      %v265 = vld [vmem:[%s262 + $0x8] sm:$0xf]
      %v266 = vld [vmem:[%s262 + $0xc] sm:$0xf]
      %v271 = vunpack.c.l.b16 %v263
      %v272 = vunpack.c.l.b16 %v264
      %v273 = vunpack.c.l.b16 %v265
      %v274 = vunpack.c.l.b16 %v266
      %v275 = vpack.c.b16 %v272, %v271
      %v276 = vpack.c.b16 %v274, %v273
      %vm279 = vcmask 261120
      %v281 = vsel %vm279, %v261, 0
      %283 = vmatprep.subr.bf16.mxu0 0
      %284 = vmatpush1.bf16.msra.mxu0 %v275
      %285 = vmatprep.subr.bf16.mxu0 0
      %286 = vmatpush1.bf16.msra.mxu0 %v276
      %287 = vmatprep.subr.bf16.mxu0 0
      %288 = vmatpush1.bf16.msra.mxu0 0
      %289 = vmatprep.subr.bf16.mxu0 0
      %290 = vmatpush1.bf16.msra.mxu0 0
      %291 = vmatprep.subr.bf16.mxu0 0
      %292 = vmatpush1.bf16.msra.mxu0 0
      %293 = vmatprep.subr.bf16.mxu0 0
      %294 = vmatpush1.bf16.msra.mxu0 0
      %295 = vmatprep.subr.bf16.mxu0 0
      %296 = vmatpush1.bf16.msra.mxu0 0
      %297 = vmatprep.subr.bf16.mxu0 0
      %298 = vmatpush1.bf16.msra.mxu0 0
      %299 = vmatprep.subr.bf16.mxu0 0
      %300 = vmatpush1.bf16.msra.mxu0 0
      %301 = vmatprep.subr.bf16.mxu0 0
      %302 = vmatpush1.bf16.msra.mxu0 0
      %303 = vmatprep.subr.bf16.mxu0 0
      %304 = vmatpush1.bf16.msra.mxu0 0
      %305 = vmatprep.subr.bf16.mxu0 0
      %306 = vmatpush1.bf16.msra.mxu0 0
      %307 = vmatprep.subr.bf16.mxu0 0
      %308 = vmatpush1.bf16.msra.mxu0 0
      %309 = vmatprep.subr.bf16.mxu0 0
      %310 = vmatpush1.bf16.msra.mxu0 0
      %311 = vmatprep.subr.bf16.mxu0 0
      %312 = vmatpush1.bf16.msra.mxu0 0
      %313 = vmatprep.subr.bf16.mxu0 0
      %314 = vmatpush1.bf16.msra.mxu0 0
      %315 = vmatprep.mubr.bf16.mxu0 0
      %316 = vmatmul.mubr.bf16.gmra.mrb[0].mxu0 %v281
      %v317 = vpop.f32.mrb[0].mxu0
      %v318 = vadd.f32 0.0, %v317
      %v319 = vpop.f32.mrb[0].mxu0
      %v320 = vpop.f32.mrb[0].mxu0
      %v321 = vpop.f32.mrb[0].mxu0
      %322 = vdwg.mxu0
      %v327 = vunpack.c.l.b16 %v256
      %v328 = vunpack.c.l.b16 %v257
      %v329 = vunpack.c.l.b16 %v258
      %v330 = vunpack.c.l.b16 %v259
      %v331 = vpack.c.b16 %v328, %v327
      %v332 = vpack.c.b16 %v330, %v329
      %v336 = vsel %vm279, %v255, 0
      %338 = vmatprep.subr.bf16.mxu0 0
      %339 = vmatpush1.bf16.msra.mxu0 %v331
      %340 = vmatprep.subr.bf16.mxu0 0
      %341 = vmatpush1.bf16.msra.mxu0 %v332
      %342 = vmatprep.subr.bf16.mxu0 0
      %343 = vmatpush1.bf16.msra.mxu0 0
      %344 = vmatprep.subr.bf16.mxu0 0
      %345 = vmatpush1.bf16.msra.mxu0 0
      %346 = vmatprep.subr.bf16.mxu0 0
      %347 = vmatpush1.bf16.msra.mxu0 0
      %348 = vmatprep.subr.bf16.mxu0 0
      %349 = vmatpush1.bf16.msra.mxu0 0
      %350 = vmatprep.subr.bf16.mxu0 0
      %351 = vmatpush1.bf16.msra.mxu0 0
      %352 = vmatprep.subr.bf16.mxu0 0
      %353 = vmatpush1.bf16.msra.mxu0 0
      %354 = vmatprep.subr.bf16.mxu0 0
      %355 = vmatpush1.bf16.msra.mxu0 0
      %356 = vmatprep.subr.bf16.mxu0 0
      %357 = vmatpush1.bf16.msra.mxu0 0
      %358 = vmatprep.subr.bf16.mxu0 0
      %359 = vmatpush1.bf16.msra.mxu0 0
      %360 = vmatprep.subr.bf16.mxu0 0
      %361 = vmatpush1.bf16.msra.mxu0 0
      %362 = vmatprep.subr.bf16.mxu0 0
      %363 = vmatpush1.bf16.msra.mxu0 0
      %364 = vmatprep.subr.bf16.mxu0 0
      %365 = vmatpush1.bf16.msra.mxu0 0
      %366 = vmatprep.subr.bf16.mxu0 0
      %367 = vmatpush1.bf16.msra.mxu0 0
      %368 = vmatprep.subr.bf16.mxu0 0
      %369 = vmatpush1.bf16.msra.mxu0 0
      %370 = vmatprep.mubr.bf16.mxu0 0
      %371 = vmatmul.mubr.bf16.gmra.mrb[0].mxu0 %v336
      %v372 = vpop.f32.mrb[0].mxu0
      %v373 = vadd.f32 %v318, %v372
      %v374 = vpop.f32.mrb[0].mxu0
      %v375 = vpop.f32.mrb[0].mxu0
      %v376 = vpop.f32.mrb[0].mxu0
      %377 = vdwg.mxu0
      %s378 = scalar_lea.vmem %s246, 2
      %v379 = vld [vmem:[%s378] sm:$0x3]
      %s380 = scalar_lea.vmem %s1, 32
      %v381 = vld [vmem:[%s380] sm:$0xf]
      %v382 = vld [vmem:[%s380 + $0x4] sm:$0xf]
      %v383 = vld [vmem:[%s380 + $0x8] sm:$0xf]
      %v384 = vld [vmem:[%s380 + $0xc] sm:$0xf]
      %v389 = vunpack.c.l.b16 %v381
      %v390 = vunpack.c.l.b16 %v382
      %v391 = vunpack.c.l.b16 %v383
      %v392 = vunpack.c.l.b16 %v384
      %v393 = vpack.c.b16 %v390, %v389
      %v394 = vpack.c.b16 %v392, %v391
      %v398 = vsel %vm279, %v379, 0
      %400 = vmatprep.subr.bf16.mxu0 0
      %401 = vmatpush1.bf16.msra.mxu0 %v393
      %402 = vmatprep.subr.bf16.mxu0 0
      %403 = vmatpush1.bf16.msra.mxu0 %v394
      %404 = vmatprep.subr.bf16.mxu0 0
      %405 = vmatpush1.bf16.msra.mxu0 0
      %406 = vmatprep.subr.bf16.mxu0 0
      %407 = vmatpush1.bf16.msra.mxu0 0
      %408 = vmatprep.subr.bf16.mxu0 0
      %409 = vmatpush1.bf16.msra.mxu0 0
      %410 = vmatprep.subr.bf16.mxu0 0
      %411 = vmatpush1.bf16.msra.mxu0 0
      %412 = vmatprep.subr.bf16.mxu0 0
      %413 = vmatpush1.bf16.msra.mxu0 0
      %414 = vmatprep.subr.bf16.mxu0 0
      %415 = vmatpush1.bf16.msra.mxu0 0
      %416 = vmatprep.subr.bf16.mxu0 0
      %417 = vmatpush1.bf16.msra.mxu0 0
      %418 = vmatprep.subr.bf16.mxu0 0
      %419 = vmatpush1.bf16.msra.mxu0 0
      %420 = vmatprep.subr.bf16.mxu0 0
      %421 = vmatpush1.bf16.msra.mxu0 0
      %422 = vmatprep.subr.bf16.mxu0 0
      %423 = vmatpush1.bf16.msra.mxu0 0
      %424 = vmatprep.subr.bf16.mxu0 0
      %425 = vmatpush1.bf16.msra.mxu0 0
      %426 = vmatprep.subr.bf16.mxu0 0
      %427 = vmatpush1.bf16.msra.mxu0 0
      %428 = vmatprep.subr.bf16.mxu0 0
      %429 = vmatpush1.bf16.msra.mxu0 0
      %430 = vmatprep.subr.bf16.mxu0 0
      %431 = vmatpush1.bf16.msra.mxu0 0
      %432 = vmatprep.mubr.bf16.mxu0 0
      %433 = vmatmul.mubr.bf16.gmra.mrb[0].mxu0 %v398
      %v434 = vpop.f32.mrb[0].mxu0
      %v435 = vadd.f32 0.0, %v434
      %v436 = vpop.f32.mrb[0].mxu0
      %v437 = vpop.f32.mrb[0].mxu0
      %v438 = vpop.f32.mrb[0].mxu0
      %439 = vdwg.mxu0
      %v440 = vadd.f32 %v373, %v435
      %s441 = scalar_lea.vmem %s246, 16
      %v442 = vld [vmem:[%s441] sm:$0x3]
      %s443 = scalar_lea.vmem %s1, 48
      %v444 = vld [vmem:[%s443] sm:$0xf]
      %v445 = vld [vmem:[%s443 + $0x4] sm:$0xf]
      %v446 = vld [vmem:[%s443 + $0x8] sm:$0xf]
      %v447 = vld [vmem:[%s443 + $0xc] sm:$0xf]
      %v452 = vunpack.c.l.b16 %v444
      %v453 = vunpack.c.l.b16 %v445
      %v454 = vunpack.c.l.b16 %v446
      %v455 = vunpack.c.l.b16 %v447
      %v456 = vpack.c.b16 %v453, %v452
      %v457 = vpack.c.b16 %v455, %v454
      %v461 = vsel %vm279, %v442, 0
      %463 = vmatprep.subr.bf16.mxu0 0
      %464 = vmatpush1.bf16.msra.mxu0 %v456
      %465 = vmatprep.subr.bf16.mxu0 0
      %466 = vmatpush1.bf16.msra.mxu0 %v457
      %467 = vmatprep.subr.bf16.mxu0 0
      %468 = vmatpush1.bf16.msra.mxu0 0
      %469 = vmatprep.subr.bf16.mxu0 0
      %470 = vmatpush1.bf16.msra.mxu0 0
      %471 = vmatprep.subr.bf16.mxu0 0
      %472 = vmatpush1.bf16.msra.mxu0 0
      %473 = vmatprep.subr.bf16.mxu0 0
      %474 = vmatpush1.bf16.msra.mxu0 0
      %475 = vmatprep.subr.bf16.mxu0 0
      %476 = vmatpush1.bf16.msra.mxu0 0
      %477 = vmatprep.subr.bf16.mxu0 0
      %478 = vmatpush1.bf16.msra.mxu0 0
      %479 = vmatprep.subr.bf16.mxu0 0
      %480 = vmatpush1.bf16.msra.mxu0 0
      %481 = vmatprep.subr.bf16.mxu0 0
      %482 = vmatpush1.bf16.msra.mxu0 0
      %483 = vmatprep.subr.bf16.mxu0 0
      %484 = vmatpush1.bf16.msra.mxu0 0
      %485 = vmatprep.subr.bf16.mxu0 0
      %486 = vmatpush1.bf16.msra.mxu0 0
      %487 = vmatprep.subr.bf16.mxu0 0
      %488 = vmatpush1.bf16.msra.mxu0 0
      %489 = vmatprep.subr.bf16.mxu0 0
      %490 = vmatpush1.bf16.msra.mxu0 0
      %491 = vmatprep.subr.bf16.mxu0 0
      %492 = vmatpush1.bf16.msra.mxu0 0
      %493 = vmatprep.subr.bf16.mxu0 0
      %494 = vmatpush1.bf16.msra.mxu0 0
      %495 = vmatprep.mubr.bf16.mxu0 0
      %496 = vmatmul.mubr.bf16.gmra.mrb[0].mxu0 %v461
      %v497 = vpop.f32.mrb[0].mxu0
      %v498 = vadd.f32 0.0, %v497
      %v499 = vpop.f32.mrb[0].mxu0
      %v500 = vpop.f32.mrb[0].mxu0
      %v501 = vpop.f32.mrb[0].mxu0
      %502 = vdwg.mxu0
      %v503 = vadd.f32 %v440, %v498
      %s504 = scalar_lea.vmem %s246, 24
      %v505 = vld [vmem:[%s504] sm:$0x3]
      %s506 = scalar_lea.vmem %s1, 64
      %v507 = vld [vmem:[%s506] sm:$0xf]
      %v508 = vld [vmem:[%s506 + $0x4] sm:$0xf]
      %v509 = vld [vmem:[%s506 + $0x8] sm:$0xf]
      %v510 = vld [vmem:[%s506 + $0xc] sm:$0xf]
      %v515 = vunpack.c.l.b16 %v507
      %v516 = vunpack.c.l.b16 %v508
      %v517 = vunpack.c.l.b16 %v509
      %v518 = vunpack.c.l.b16 %v510
      %v519 = vpack.c.b16 %v516, %v515
      %v520 = vpack.c.b16 %v518, %v517
      %v524 = vsel %vm279, %v505, 0
      %526 = vmatprep.subr.bf16.mxu0 0
      %527 = vmatpush1.bf16.msra.mxu0 %v519
      %528 = vmatprep.subr.bf16.mxu0 0
      %529 = vmatpush1.bf16.msra.mxu0 %v520
      %530 = vmatprep.subr.bf16.mxu0 0
      %531 = vmatpush1.bf16.msra.mxu0 0
      %532 = vmatprep.subr.bf16.mxu0 0
      %533 = vmatpush1.bf16.msra.mxu0 0
      %534 = vmatprep.subr.bf16.mxu0 0
      %535 = vmatpush1.bf16.msra.mxu0 0
      %536 = vmatprep.subr.bf16.mxu0 0
      %537 = vmatpush1.bf16.msra.mxu0 0
      %538 = vmatprep.subr.bf16.mxu0 0
      %539 = vmatpush1.bf16.msra.mxu0 0
      %540 = vmatprep.subr.bf16.mxu0 0
      %541 = vmatpush1.bf16.msra.mxu0 0
      %542 = vmatprep.subr.bf16.mxu0 0
      %543 = vmatpush1.bf16.msra.mxu0 0
      %544 = vmatprep.subr.bf16.mxu0 0
      %545 = vmatpush1.bf16.msra.mxu0 0
      %546 = vmatprep.subr.bf16.mxu0 0
      %547 = vmatpush1.bf16.msra.mxu0 0
      %548 = vmatprep.subr.bf16.mxu0 0
      %549 = vmatpush1.bf16.msra.mxu0 0
      %550 = vmatprep.subr.bf16.mxu0 0
      %551 = vmatpush1.bf16.msra.mxu0 0
      %552 = vmatprep.subr.bf16.mxu0 0
      %553 = vmatpush1.bf16.msra.mxu0 0
      %554 = vmatprep.subr.bf16.mxu0 0
      %555 = vmatpush1.bf16.msra.mxu0 0
      %556 = vmatprep.subr.bf16.mxu0 0
      %557 = vmatpush1.bf16.msra.mxu0 0
      %558 = vmatprep.mubr.bf16.mxu0 0
      %559 = vmatmul.mubr.bf16.gmra.mrb[0].mxu0 %v524
      %v560 = vpop.f32.mrb[0].mxu0
      %v561 = vadd.f32 0.0, %v560
      %v562 = vpop.f32.mrb[0].mxu0
      %v563 = vpop.f32.mrb[0].mxu0
      %v564 = vpop.f32.mrb[0].mxu0
      %565 = vdwg.mxu0
      %v566 = vadd.f32 %v503, %v561
      %s567 = scalar_lea.vmem %s246, 18
      %v568 = vld [vmem:[%s567] sm:$0x3]
      %s569 = scalar_lea.vmem %s1, 80
      %v570 = vld [vmem:[%s569] sm:$0xf]
      %v571 = vld [vmem:[%s569 + $0x4] sm:$0xf]
      %v572 = vld [vmem:[%s569 + $0x8] sm:$0xf]
      %v573 = vld [vmem:[%s569 + $0xc] sm:$0xf]
      %v578 = vunpack.c.l.b16 %v570
      %v579 = vunpack.c.l.b16 %v571
      %v580 = vunpack.c.l.b16 %v572
      %v581 = vunpack.c.l.b16 %v573
      %v582 = vpack.c.b16 %v579, %v578
      %v583 = vpack.c.b16 %v581, %v580
      %v587 = vsel %vm279, %v568, 0
      %589 = vmatprep.subr.bf16.mxu0 0
      %590 = vmatpush1.bf16.msra.mxu0 %v582
      %591 = vmatprep.subr.bf16.mxu0 0
      %592 = vmatpush1.bf16.msra.mxu0 %v583
      %593 = vmatprep.subr.bf16.mxu0 0
      %594 = vmatpush1.bf16.msra.mxu0 0
      %595 = vmatprep.subr.bf16.mxu0 0
      %596 = vmatpush1.bf16.msra.mxu0 0
      %597 = vmatprep.subr.bf16.mxu0 0
      %598 = vmatpush1.bf16.msra.mxu0 0
      %599 = vmatprep.subr.bf16.mxu0 0
      %600 = vmatpush1.bf16.msra.mxu0 0
      %601 = vmatprep.subr.bf16.mxu0 0
      %602 = vmatpush1.bf16.msra.mxu0 0
      %603 = vmatprep.subr.bf16.mxu0 0
      %604 = vmatpush1.bf16.msra.mxu0 0
      %605 = vmatprep.subr.bf16.mxu0 0
      %606 = vmatpush1.bf16.msra.mxu0 0
      %607 = vmatprep.subr.bf16.mxu0 0
      %608 = vmatpush1.bf16.msra.mxu0 0
      %609 = vmatprep.subr.bf16.mxu0 0
      %610 = vmatpush1.bf16.msra.mxu0 0
      %611 = vmatprep.subr.bf16.mxu0 0
      %612 = vmatpush1.bf16.msra.mxu0 0
      %613 = vmatprep.subr.bf16.mxu0 0
      %614 = vmatpush1.bf16.msra.mxu0 0
      %615 = vmatprep.subr.bf16.mxu0 0
      %616 = vmatpush1.bf16.msra.mxu0 0
      %617 = vmatprep.subr.bf16.mxu0 0
      %618 = vmatpush1.bf16.msra.mxu0 0
      %619 = vmatprep.subr.bf16.mxu0 0
      %620 = vmatpush1.bf16.msra.mxu0 0
      %621 = vmatprep.mubr.bf16.mxu0 0
      %622 = vmatmul.mubr.bf16.gmra.mrb[0].mxu0 %v587
      %v623 = vpop.f32.mrb[0].mxu0
      %v624 = vadd.f32 0.0, %v623
      %v625 = vpop.f32.mrb[0].mxu0
      %v626 = vpop.f32.mrb[0].mxu0
      %v627 = vpop.f32.mrb[0].mxu0
      %628 = vdwg.mxu0
      %v629 = vadd.f32 %v566, %v624
      %s630 = scalar_lea.vmem %s246, 32
      %v631 = vld [vmem:[%s630] sm:$0x3]
      %s632 = scalar_lea.vmem %s1, 96
      %v633 = vld [vmem:[%s632] sm:$0xf]
      %v634 = vld [vmem:[%s632 + $0x4] sm:$0xf]
      %v635 = vld [vmem:[%s632 + $0x8] sm:$0xf]
      %v636 = vld [vmem:[%s632 + $0xc] sm:$0xf]
      %v641 = vunpack.c.l.b16 %v633
      %v642 = vunpack.c.l.b16 %v634
      %v643 = vunpack.c.l.b16 %v635
      %v644 = vunpack.c.l.b16 %v636
      %v645 = vpack.c.b16 %v642, %v641
      %v646 = vpack.c.b16 %v644, %v643
      %v650 = vsel %vm279, %v631, 0
      %652 = vmatprep.subr.bf16.mxu0 0
      %653 = vmatpush1.bf16.msra.mxu0 %v645
      %654 = vmatprep.subr.bf16.mxu0 0
      %655 = vmatpush1.bf16.msra.mxu0 %v646
      %656 = vmatprep.subr.bf16.mxu0 0
      %657 = vmatpush1.bf16.msra.mxu0 0
      %658 = vmatprep.subr.bf16.mxu0 0
      %659 = vmatpush1.bf16.msra.mxu0 0
      %660 = vmatprep.subr.bf16.mxu0 0
      %661 = vmatpush1.bf16.msra.mxu0 0
      %662 = vmatprep.subr.bf16.mxu0 0
      %663 = vmatpush1.bf16.msra.mxu0 0
      %664 = vmatprep.subr.bf16.mxu0 0
      %665 = vmatpush1.bf16.msra.mxu0 0
      %666 = vmatprep.subr.bf16.mxu0 0
      %667 = vmatpush1.bf16.msra.mxu0 0
      %668 = vmatprep.subr.bf16.mxu0 0
      %669 = vmatpush1.bf16.msra.mxu0 0
      %670 = vmatprep.subr.bf16.mxu0 0
      %671 = vmatpush1.bf16.msra.mxu0 0
      %672 = vmatprep.subr.bf16.mxu0 0
      %673 = vmatpush1.bf16.msra.mxu0 0
      %674 = vmatprep.subr.bf16.mxu0 0
      %675 = vmatpush1.bf16.msra.mxu0 0
      %676 = vmatprep.subr.bf16.mxu0 0
      %677 = vmatpush1.bf16.msra.mxu0 0
      %678 = vmatprep.subr.bf16.mxu0 0
      %679 = vmatpush1.bf16.msra.mxu0 0
      %680 = vmatprep.subr.bf16.mxu0 0
      %681 = vmatpush1.bf16.msra.mxu0 0
      %682 = vmatprep.subr.bf16.mxu0 0
      %683 = vmatpush1.bf16.msra.mxu0 0
      %684 = vmatprep.mubr.bf16.mxu0 0
      %685 = vmatmul.mubr.bf16.gmra.mrb[0].mxu0 %v650
      %v686 = vpop.f32.mrb[0].mxu0
      %v687 = vadd.f32 0.0, %v686
      %v688 = vpop.f32.mrb[0].mxu0
      %v689 = vpop.f32.mrb[0].mxu0
      %v690 = vpop.f32.mrb[0].mxu0
      %691 = vdwg.mxu0
      %v692 = vadd.f32 %v629, %v687
      %s693 = scalar_lea.vmem %s246, 40
      %v694 = vld [vmem:[%s693] sm:$0x3]
      %s695 = scalar_lea.vmem %s1, 112
      %v696 = vld [vmem:[%s695] sm:$0xf]
      %v697 = vld [vmem:[%s695 + $0x4] sm:$0xf]
      %v698 = vld [vmem:[%s695 + $0x8] sm:$0xf]
      %v699 = vld [vmem:[%s695 + $0xc] sm:$0xf]
      %v704 = vunpack.c.l.b16 %v696
      %v705 = vunpack.c.l.b16 %v697
      %v706 = vunpack.c.l.b16 %v698
      %v707 = vunpack.c.l.b16 %v699
      %v708 = vpack.c.b16 %v705, %v704
      %v709 = vpack.c.b16 %v707, %v706
      %v713 = vsel %vm279, %v694, 0
      %715 = vmatprep.subr.bf16.mxu0 0
      %716 = vmatpush1.bf16.msra.mxu0 %v708
      %717 = vmatprep.subr.bf16.mxu0 0
      %718 = vmatpush1.bf16.msra.mxu0 %v709
      %719 = vmatprep.subr.bf16.mxu0 0
      %720 = vmatpush1.bf16.msra.mxu0 0
      %721 = vmatprep.subr.bf16.mxu0 0
      %722 = vmatpush1.bf16.msra.mxu0 0
      %723 = vmatprep.subr.bf16.mxu0 0
      %724 = vmatpush1.bf16.msra.mxu0 0
      %725 = vmatprep.subr.bf16.mxu0 0
      %726 = vmatpush1.bf16.msra.mxu0 0
      %727 = vmatprep.subr.bf16.mxu0 0
      %728 = vmatpush1.bf16.msra.mxu0 0
      %729 = vmatprep.subr.bf16.mxu0 0
      %730 = vmatpush1.bf16.msra.mxu0 0
      %731 = vmatprep.subr.bf16.mxu0 0
      %732 = vmatpush1.bf16.msra.mxu0 0
      %733 = vmatprep.subr.bf16.mxu0 0
      %734 = vmatpush1.bf16.msra.mxu0 0
      %735 = vmatprep.subr.bf16.mxu0 0
      %736 = vmatpush1.bf16.msra.mxu0 0
      %737 = vmatprep.subr.bf16.mxu0 0
      %738 = vmatpush1.bf16.msra.mxu0 0
      %739 = vmatprep.subr.bf16.mxu0 0
      %740 = vmatpush1.bf16.msra.mxu0 0
      %741 = vmatprep.subr.bf16.mxu0 0
      %742 = vmatpush1.bf16.msra.mxu0 0
      %743 = vmatprep.subr.bf16.mxu0 0
      %744 = vmatpush1.bf16.msra.mxu0 0
      %745 = vmatprep.subr.bf16.mxu0 0
      %746 = vmatpush1.bf16.msra.mxu0 0
      %747 = vmatprep.mubr.bf16.mxu0 0
      %748 = vmatmul.mubr.bf16.gmra.mrb[0].mxu0 %v713
      %v749 = vpop.f32.mrb[0].mxu0
      %v750 = vadd.f32 0.0, %v749
      %v751 = vpop.f32.mrb[0].mxu0
      %v752 = vpop.f32.mrb[0].mxu0
      %v753 = vpop.f32.mrb[0].mxu0
      %754 = vdwg.mxu0
      %v755 = vadd.f32 %v692, %v750
      %s756 = scalar_lea.vmem %s246, 34
      %v757 = vld [vmem:[%s756] sm:$0x3]
      %s758 = scalar_lea.vmem %s1, 128
      %v759 = vld [vmem:[%s758] sm:$0xf]
      %v760 = vld [vmem:[%s758 + $0x4] sm:$0xf]
      %v761 = vld [vmem:[%s758 + $0x8] sm:$0xf]
      %v762 = vld [vmem:[%s758 + $0xc] sm:$0xf]
      %v767 = vunpack.c.l.b16 %v759
      %v768 = vunpack.c.l.b16 %v760
      %v769 = vunpack.c.l.b16 %v761
      %v770 = vunpack.c.l.b16 %v762
      %v771 = vpack.c.b16 %v768, %v767
      %v772 = vpack.c.b16 %v770, %v769
      %v776 = vsel %vm279, %v757, 0
      %778 = vmatprep.subr.bf16.mxu0 0
      %779 = vmatpush1.bf16.msra.mxu0 %v771
      %780 = vmatprep.subr.bf16.mxu0 0
      %781 = vmatpush1.bf16.msra.mxu0 %v772
      %782 = vmatprep.subr.bf16.mxu0 0
      %783 = vmatpush1.bf16.msra.mxu0 0
      %784 = vmatprep.subr.bf16.mxu0 0
      %785 = vmatpush1.bf16.msra.mxu0 0
      %786 = vmatprep.subr.bf16.mxu0 0
      %787 = vmatpush1.bf16.msra.mxu0 0
      %788 = vmatprep.subr.bf16.mxu0 0
      %789 = vmatpush1.bf16.msra.mxu0 0
      %790 = vmatprep.subr.bf16.mxu0 0
      %791 = vmatpush1.bf16.msra.mxu0 0
      %792 = vmatprep.subr.bf16.mxu0 0
      %793 = vmatpush1.bf16.msra.mxu0 0
      %794 = vmatprep.subr.bf16.mxu0 0
      %795 = vmatpush1.bf16.msra.mxu0 0
      %796 = vmatprep.subr.bf16.mxu0 0
      %797 = vmatpush1.bf16.msra.mxu0 0
      %798 = vmatprep.subr.bf16.mxu0 0
      %799 = vmatpush1.bf16.msra.mxu0 0
      %800 = vmatprep.subr.bf16.mxu0 0
      %801 = vmatpush1.bf16.msra.mxu0 0
      %802 = vmatprep.subr.bf16.mxu0 0
      %803 = vmatpush1.bf16.msra.mxu0 0
      %804 = vmatprep.subr.bf16.mxu0 0
      %805 = vmatpush1.bf16.msra.mxu0 0
      %806 = vmatprep.subr.bf16.mxu0 0
      %807 = vmatpush1.bf16.msra.mxu0 0
      %808 = vmatprep.subr.bf16.mxu0 0
      %809 = vmatpush1.bf16.msra.mxu0 0
      %810 = vmatprep.mubr.bf16.mxu0 0
      %811 = vmatmul.mubr.bf16.gmra.mrb[0].mxu0 %v776
      %v812 = vpop.f32.mrb[0].mxu0
      %v813 = vadd.f32 0.0, %v812
      %v814 = vpop.f32.mrb[0].mxu0
      %v815 = vpop.f32.mrb[0].mxu0
      %v816 = vpop.f32.mrb[0].mxu0
      %817 = vdwg.mxu0
      %v818 = vadd.f32 %v755, %v813
      %v819 = vld [vmem:[%s2] sm:$0x1]
      %v821 = vlaneseq
      %v822 = vshrl.u32 %v821, 7
      %v823 = vsub.s32 0, %v822
      %v824 = vrot.slane %v819, %v823
      %v826 = vadd.f32 %v818, %v824
      %v827 = vmax.f32 %v826, 0.0
      %v828 = vpack.c.bf16 %v827, %v827
      %v829 = vld [vmem:[%s3] sm:$0xf]
      %v830 = vld [vmem:[%s3 + $0x4] sm:$0xf]
      %v831 = vld [vmem:[%s3 + $0x8] sm:$0xf]
      %v832 = vld [vmem:[%s3 + $0xc] sm:$0xf]
      %s833 = scalar_lea.vmem %s246, 10
      %v834 = vld [vmem:[%s833] sm:$0x3]
      %v836 = vsel %vm279, %v834, 0
      %838 = vmatprep.subr.bf16.mxu0 0
      %839 = vmatpush1.bf16.msra.mxu0 %v275
      %840 = vmatprep.subr.bf16.mxu0 0
      %841 = vmatpush1.bf16.msra.mxu0 %v276
      %842 = vmatprep.subr.bf16.mxu0 0
      %843 = vmatpush1.bf16.msra.mxu0 0
      %844 = vmatprep.subr.bf16.mxu0 0
      %845 = vmatpush1.bf16.msra.mxu0 0
      %846 = vmatprep.subr.bf16.mxu0 0
      %847 = vmatpush1.bf16.msra.mxu0 0
      %848 = vmatprep.subr.bf16.mxu0 0
      %849 = vmatpush1.bf16.msra.mxu0 0
      %850 = vmatprep.subr.bf16.mxu0 0
      %851 = vmatpush1.bf16.msra.mxu0 0
      %852 = vmatprep.subr.bf16.mxu0 0
      %853 = vmatpush1.bf16.msra.mxu0 0
      %854 = vmatprep.subr.bf16.mxu0 0
      %855 = vmatpush1.bf16.msra.mxu0 0
      %856 = vmatprep.subr.bf16.mxu0 0
      %857 = vmatpush1.bf16.msra.mxu0 0
      %858 = vmatprep.subr.bf16.mxu0 0
      %859 = vmatpush1.bf16.msra.mxu0 0
      %860 = vmatprep.subr.bf16.mxu0 0
      %861 = vmatpush1.bf16.msra.mxu0 0
      %862 = vmatprep.subr.bf16.mxu0 0
      %863 = vmatpush1.bf16.msra.mxu0 0
      %864 = vmatprep.subr.bf16.mxu0 0
      %865 = vmatpush1.bf16.msra.mxu0 0
      %866 = vmatprep.subr.bf16.mxu0 0
      %867 = vmatpush1.bf16.msra.mxu0 0
      %868 = vmatprep.subr.bf16.mxu0 0
      %869 = vmatpush1.bf16.msra.mxu0 0
      %870 = vmatprep.mubr.bf16.mxu0 0
      %871 = vmatmul.mubr.bf16.gmra.mrb[0].mxu0 %v836
      %v872 = vpop.f32.mrb[0].mxu0
      %v873 = vadd.f32 0.0, %v872
      %v874 = vpop.f32.mrb[0].mxu0
      %v875 = vpop.f32.mrb[0].mxu0
      %v876 = vpop.f32.mrb[0].mxu0
      %877 = vdwg.mxu0
      %878 = vmatprep.subr.bf16.mxu0 0
      %879 = vmatpush1.bf16.msra.mxu0 %v331
      %880 = vmatprep.subr.bf16.mxu0 0
      %881 = vmatpush1.bf16.msra.mxu0 %v332
      %882 = vmatprep.subr.bf16.mxu0 0
      %883 = vmatpush1.bf16.msra.mxu0 0
      %884 = vmatprep.subr.bf16.mxu0 0
      %885 = vmatpush1.bf16.msra.mxu0 0
      %886 = vmatprep.subr.bf16.mxu0 0
      %887 = vmatpush1.bf16.msra.mxu0 0
      %888 = vmatprep.subr.bf16.mxu0 0
      %889 = vmatpush1.bf16.msra.mxu0 0
      %890 = vmatprep.subr.bf16.mxu0 0
      %891 = vmatpush1.bf16.msra.mxu0 0
      %892 = vmatprep.subr.bf16.mxu0 0
      %893 = vmatpush1.bf16.msra.mxu0 0
      %894 = vmatprep.subr.bf16.mxu0 0
      %895 = vmatpush1.bf16.msra.mxu0 0
      %896 = vmatprep.subr.bf16.mxu0 0
      %897 = vmatpush1.bf16.msra.mxu0 0
      %898 = vmatprep.subr.bf16.mxu0 0
      %899 = vmatpush1.bf16.msra.mxu0 0
      %900 = vmatprep.subr.bf16.mxu0 0
      %901 = vmatpush1.bf16.msra.mxu0 0
      %902 = vmatprep.subr.bf16.mxu0 0
      %903 = vmatpush1.bf16.msra.mxu0 0
      %904 = vmatprep.subr.bf16.mxu0 0
      %905 = vmatpush1.bf16.msra.mxu0 0
      %906 = vmatprep.subr.bf16.mxu0 0
      %907 = vmatpush1.bf16.msra.mxu0 0
      %908 = vmatprep.subr.bf16.mxu0 0
      %909 = vmatpush1.bf16.msra.mxu0 0
      %910 = vmatprep.mubr.bf16.mxu0 0
      %911 = vmatmul.mubr.bf16.gmra.mrb[0].mxu0 %v398
      %v912 = vpop.f32.mrb[0].mxu0
      %v913 = vadd.f32 %v873, %v912
      %v914 = vpop.f32.mrb[0].mxu0
      %v915 = vpop.f32.mrb[0].mxu0
      %v916 = vpop.f32.mrb[0].mxu0
      %917 = vdwg.mxu0
      %s918 = scalar_lea.vmem %s246, 4
      %v919 = vld [vmem:[%s918] sm:$0x3]
      %v921 = vsel %vm279, %v919, 0
      %923 = vmatprep.subr.bf16.mxu0 0
      %924 = vmatpush1.bf16.msra.mxu0 %v393
      %925 = vmatprep.subr.bf16.mxu0 0
      %926 = vmatpush1.bf16.msra.mxu0 %v394
      %927 = vmatprep.subr.bf16.mxu0 0
      %928 = vmatpush1.bf16.msra.mxu0 0
      %929 = vmatprep.subr.bf16.mxu0 0
      %930 = vmatpush1.bf16.msra.mxu0 0
      %931 = vmatprep.subr.bf16.mxu0 0
      %932 = vmatpush1.bf16.msra.mxu0 0
      %933 = vmatprep.subr.bf16.mxu0 0
      %934 = vmatpush1.bf16.msra.mxu0 0
      %935 = vmatprep.subr.bf16.mxu0 0
      %936 = vmatpush1.bf16.msra.mxu0 0
      %937 = vmatprep.subr.bf16.mxu0 0
      %938 = vmatpush1.bf16.msra.mxu0 0
      %939 = vmatprep.subr.bf16.mxu0 0
      %940 = vmatpush1.bf16.msra.mxu0 0
      %941 = vmatprep.subr.bf16.mxu0 0
      %942 = vmatpush1.bf16.msra.mxu0 0
      %943 = vmatprep.subr.bf16.mxu0 0
      %944 = vmatpush1.bf16.msra.mxu0 0
      %945 = vmatprep.subr.bf16.mxu0 0
      %946 = vmatpush1.bf16.msra.mxu0 0
      %947 = vmatprep.subr.bf16.mxu0 0
      %948 = vmatpush1.bf16.msra.mxu0 0
      %949 = vmatprep.subr.bf16.mxu0 0
      %950 = vmatpush1.bf16.msra.mxu0 0
      %951 = vmatprep.subr.bf16.mxu0 0
      %952 = vmatpush1.bf16.msra.mxu0 0
      %953 = vmatprep.subr.bf16.mxu0 0
      %954 = vmatpush1.bf16.msra.mxu0 0
      %955 = vmatprep.mubr.bf16.mxu0 0
      %956 = vmatmul.mubr.bf16.gmra.mrb[0].mxu0 %v921
      %v957 = vpop.f32.mrb[0].mxu0
      %v958 = vadd.f32 0.0, %v957
      %v959 = vpop.f32.mrb[0].mxu0
      %v960 = vpop.f32.mrb[0].mxu0
      %v961 = vpop.f32.mrb[0].mxu0
      %962 = vdwg.mxu0
      %v963 = vadd.f32 %v913, %v958
      %964 = vmatprep.subr.bf16.mxu0 0
      %965 = vmatpush1.bf16.msra.mxu0 %v456
      %966 = vmatprep.subr.bf16.mxu0 0
      %967 = vmatpush1.bf16.msra.mxu0 %v457
      %968 = vmatprep.subr.bf16.mxu0 0
      %969 = vmatpush1.bf16.msra.mxu0 0
      %970 = vmatprep.subr.bf16.mxu0 0
      %971 = vmatpush1.bf16.msra.mxu0 0
      %972 = vmatprep.subr.bf16.mxu0 0
      %973 = vmatpush1.bf16.msra.mxu0 0
      %974 = vmatprep.subr.bf16.mxu0 0
      %975 = vmatpush1.bf16.msra.mxu0 0
      %976 = vmatprep.subr.bf16.mxu0 0
      %977 = vmatpush1.bf16.msra.mxu0 0
      %978 = vmatprep.subr.bf16.mxu0 0
      %979 = vmatpush1.bf16.msra.mxu0 0
      %980 = vmatprep.subr.bf16.mxu0 0
      %981 = vmatpush1.bf16.msra.mxu0 0
      %982 = vmatprep.subr.bf16.mxu0 0
      %983 = vmatpush1.bf16.msra.mxu0 0
      %984 = vmatprep.subr.bf16.mxu0 0
      %985 = vmatpush1.bf16.msra.mxu0 0
      %986 = vmatprep.subr.bf16.mxu0 0
      %987 = vmatpush1.bf16.msra.mxu0 0
      %988 = vmatprep.subr.bf16.mxu0 0
      %989 = vmatpush1.bf16.msra.mxu0 0
      %990 = vmatprep.subr.bf16.mxu0 0
      %991 = vmatpush1.bf16.msra.mxu0 0
      %992 = vmatprep.subr.bf16.mxu0 0
      %993 = vmatpush1.bf16.msra.mxu0 0
      %994 = vmatprep.subr.bf16.mxu0 0
      %995 = vmatpush1.bf16.msra.mxu0 0
      %996 = vmatprep.mubr.bf16.mxu0 0
      %997 = vmatmul.mubr.bf16.gmra.mrb[0].mxu0 %v587
      %v998 = vpop.f32.mrb[0].mxu0
      %v999 = vadd.f32 0.0, %v998
      %v1000 = vpop.f32.mrb[0].mxu0
      %v1001 = vpop.f32.mrb[0].mxu0
      %v1002 = vpop.f32.mrb[0].mxu0
      %1003 = vdwg.mxu0
      %v1004 = vadd.f32 %v963, %v999
      %s1005 = scalar_lea.vmem %s246, 26
      %v1006 = vld [vmem:[%s1005] sm:$0x3]
      %v1008 = vsel %vm279, %v1006, 0
      %1010 = vmatprep.subr.bf16.mxu0 0
      %1011 = vmatpush1.bf16.msra.mxu0 %v519
      %1012 = vmatprep.subr.bf16.mxu0 0
      %1013 = vmatpush1.bf16.msra.mxu0 %v520
      %1014 = vmatprep.subr.bf16.mxu0 0
      %1015 = vmatpush1.bf16.msra.mxu0 0
      %1016 = vmatprep.subr.bf16.mxu0 0
      %1017 = vmatpush1.bf16.msra.mxu0 0
      %1018 = vmatprep.subr.bf16.mxu0 0
      %1019 = vmatpush1.bf16.msra.mxu0 0
      %1020 = vmatprep.subr.bf16.mxu0 0
      %1021 = vmatpush1.bf16.msra.mxu0 0
      %1022 = vmatprep.subr.bf16.mxu0 0
      %1023 = vmatpush1.bf16.msra.mxu0 0
      %1024 = vmatprep.subr.bf16.mxu0 0
      %1025 = vmatpush1.bf16.msra.mxu0 0
      %1026 = vmatprep.subr.bf16.mxu0 0
      %1027 = vmatpush1.bf16.msra.mxu0 0
      %1028 = vmatprep.subr.bf16.mxu0 0
      %1029 = vmatpush1.bf16.msra.mxu0 0
      %1030 = vmatprep.subr.bf16.mxu0 0
      %1031 = vmatpush1.bf16.msra.mxu0 0
      %1032 = vmatprep.subr.bf16.mxu0 0
      %1033 = vmatpush1.bf16.msra.mxu0 0
      %1034 = vmatprep.subr.bf16.mxu0 0
      %1035 = vmatpush1.bf16.msra.mxu0 0
      %1036 = vmatprep.subr.bf16.mxu0 0
      %1037 = vmatpush1.bf16.msra.mxu0 0
      %1038 = vmatprep.subr.bf16.mxu0 0
      %1039 = vmatpush1.bf16.msra.mxu0 0
      %1040 = vmatprep.subr.bf16.mxu0 0
      %1041 = vmatpush1.bf16.msra.mxu0 0
      %1042 = vmatprep.mubr.bf16.mxu0 0
      %1043 = vmatmul.mubr.bf16.gmra.mrb[0].mxu0 %v1008
      %v1044 = vpop.f32.mrb[0].mxu0
      %v1045 = vadd.f32 0.0, %v1044
      %v1046 = vpop.f32.mrb[0].mxu0
      %v1047 = vpop.f32.mrb[0].mxu0
      %v1048 = vpop.f32.mrb[0].mxu0
      %1049 = vdwg.mxu0
      %v1050 = vadd.f32 %v1004, %v1045
      %s1051 = scalar_lea.vmem %s246, 20
      %v1052 = vld [vmem:[%s1051] sm:$0x3]
      %v1054 = vsel %vm279, %v1052, 0
      %1056 = vmatprep.subr.bf16.mxu0 0
      %1057 = vmatpush1.bf16.msra.mxu0 %v582
      %1058 = vmatprep.subr.bf16.mxu0 0
      %1059 = vmatpush1.bf16.msra.mxu0 %v583
      %1060 = vmatprep.subr.bf16.mxu0 0
      %1061 = vmatpush1.bf16.msra.mxu0 0
      %1062 = vmatprep.subr.bf16.mxu0 0
      %1063 = vmatpush1.bf16.msra.mxu0 0
      %1064 = vmatprep.subr.bf16.mxu0 0
      %1065 = vmatpush1.bf16.msra.mxu0 0
      %1066 = vmatprep.subr.bf16.mxu0 0
      %1067 = vmatpush1.bf16.msra.mxu0 0
      %1068 = vmatprep.subr.bf16.mxu0 0
      %1069 = vmatpush1.bf16.msra.mxu0 0
      %1070 = vmatprep.subr.bf16.mxu0 0
      %1071 = vmatpush1.bf16.msra.mxu0 0
      %1072 = vmatprep.subr.bf16.mxu0 0
      %1073 = vmatpush1.bf16.msra.mxu0 0
      %1074 = vmatprep.subr.bf16.mxu0 0
      %1075 = vmatpush1.bf16.msra.mxu0 0
      %1076 = vmatprep.subr.bf16.mxu0 0
      %1077 = vmatpush1.bf16.msra.mxu0 0
      %1078 = vmatprep.subr.bf16.mxu0 0
      %1079 = vmatpush1.bf16.msra.mxu0 0
      %1080 = vmatprep.subr.bf16.mxu0 0
      %1081 = vmatpush1.bf16.msra.mxu0 0
      %1082 = vmatprep.subr.bf16.mxu0 0
      %1083 = vmatpush1.bf16.msra.mxu0 0
      %1084 = vmatprep.subr.bf16.mxu0 0
      %1085 = vmatpush1.bf16.msra.mxu0 0
      %1086 = vmatprep.subr.bf16.mxu0 0
      %1087 = vmatpush1.bf16.msra.mxu0 0
      %1088 = vmatprep.mubr.bf16.mxu0 0
      %1089 = vmatmul.mubr.bf16.gmra.mrb[0].mxu0 %v1054
      %v1090 = vpop.f32.mrb[0].mxu0
      %v1091 = vadd.f32 0.0, %v1090
      %v1092 = vpop.f32.mrb[0].mxu0
      %v1093 = vpop.f32.mrb[0].mxu0
      %v1094 = vpop.f32.mrb[0].mxu0
      %1095 = vdwg.mxu0
      %v1096 = vadd.f32 %v1050, %v1091
      %1097 = vmatprep.subr.bf16.mxu0 0
      %1098 = vmatpush1.bf16.msra.mxu0 %v645
      %1099 = vmatprep.subr.bf16.mxu0 0
      %1100 = vmatpush1.bf16.msra.mxu0 %v646
      %1101 = vmatprep.subr.bf16.mxu0 0
      %1102 = vmatpush1.bf16.msra.mxu0 0
      %1103 = vmatprep.subr.bf16.mxu0 0
      %1104 = vmatpush1.bf16.msra.mxu0 0
      %1105 = vmatprep.subr.bf16.mxu0 0
      %1106 = vmatpush1.bf16.msra.mxu0 0
      %1107 = vmatprep.subr.bf16.mxu0 0
      %1108 = vmatpush1.bf16.msra.mxu0 0
      %1109 = vmatprep.subr.bf16.mxu0 0
      %1110 = vmatpush1.bf16.msra.mxu0 0
      %1111 = vmatprep.subr.bf16.mxu0 0
      %1112 = vmatpush1.bf16.msra.mxu0 0
      %1113 = vmatprep.subr.bf16.mxu0 0
      %1114 = vmatpush1.bf16.msra.mxu0 0
      %1115 = vmatprep.subr.bf16.mxu0 0
      %1116 = vmatpush1.bf16.msra.mxu0 0
      %1117 = vmatprep.subr.bf16.mxu0 0
      %1118 = vmatpush1.bf16.msra.mxu0 0
      %1119 = vmatprep.subr.bf16.mxu0 0
      %1120 = vmatpush1.bf16.msra.mxu0 0
      %1121 = vmatprep.subr.bf16.mxu0 0
      %1122 = vmatpush1.bf16.msra.mxu0 0
      %1123 = vmatprep.subr.bf16.mxu0 0
      %1124 = vmatpush1.bf16.msra.mxu0 0
      %1125 = vmatprep.subr.bf16.mxu0 0
      %1126 = vmatpush1.bf16.msra.mxu0 0
      %1127 = vmatprep.subr.bf16.mxu0 0
      %1128 = vmatpush1.bf16.msra.mxu0 0
      %1129 = vmatprep.mubr.bf16.mxu0 0
      %1130 = vmatmul.mubr.bf16.gmra.mrb[0].mxu0 %v776
      %v1131 = vpop.f32.mrb[0].mxu0
      %v1132 = vadd.f32 0.0, %v1131
      %v1133 = vpop.f32.mrb[0].mxu0
      %v1134 = vpop.f32.mrb[0].mxu0
      %v1135 = vpop.f32.mrb[0].mxu0
      %1136 = vdwg.mxu0
      %v1137 = vadd.f32 %v1096, %v1132
      %s1138 = scalar_lea.vmem %s246, 42
      %v1139 = vld [vmem:[%s1138] sm:$0x3]
      %v1141 = vsel %vm279, %v1139, 0
      %1143 = vmatprep.subr.bf16.mxu0 0
      %1144 = vmatpush1.bf16.msra.mxu0 %v708
      %1145 = vmatprep.subr.bf16.mxu0 0
      %1146 = vmatpush1.bf16.msra.mxu0 %v709
      %1147 = vmatprep.subr.bf16.mxu0 0
      %1148 = vmatpush1.bf16.msra.mxu0 0
      %1149 = vmatprep.subr.bf16.mxu0 0
      %1150 = vmatpush1.bf16.msra.mxu0 0
      %1151 = vmatprep.subr.bf16.mxu0 0
      %1152 = vmatpush1.bf16.msra.mxu0 0
      %1153 = vmatprep.subr.bf16.mxu0 0
      %1154 = vmatpush1.bf16.msra.mxu0 0
      %1155 = vmatprep.subr.bf16.mxu0 0
      %1156 = vmatpush1.bf16.msra.mxu0 0
      %1157 = vmatprep.subr.bf16.mxu0 0
      %1158 = vmatpush1.bf16.msra.mxu0 0
      %1159 = vmatprep.subr.bf16.mxu0 0
      %1160 = vmatpush1.bf16.msra.mxu0 0
      %1161 = vmatprep.subr.bf16.mxu0 0
      %1162 = vmatpush1.bf16.msra.mxu0 0
      %1163 = vmatprep.subr.bf16.mxu0 0
      %1164 = vmatpush1.bf16.msra.mxu0 0
      %1165 = vmatprep.subr.bf16.mxu0 0
      %1166 = vmatpush1.bf16.msra.mxu0 0
      %1167 = vmatprep.subr.bf16.mxu0 0
      %1168 = vmatpush1.bf16.msra.mxu0 0
      %1169 = vmatprep.subr.bf16.mxu0 0
      %1170 = vmatpush1.bf16.msra.mxu0 0
      %1171 = vmatprep.subr.bf16.mxu0 0
      %1172 = vmatpush1.bf16.msra.mxu0 0
      %1173 = vmatprep.subr.bf16.mxu0 0
      %1174 = vmatpush1.bf16.msra.mxu0 0
      %1175 = vmatprep.mubr.bf16.mxu0 0
      %1176 = vmatmul.mubr.bf16.gmra.mrb[0].mxu0 %v1141
      %v1177 = vpop.f32.mrb[0].mxu0
      %v1178 = vadd.f32 0.0, %v1177
      %v1179 = vpop.f32.mrb[0].mxu0
      %v1180 = vpop.f32.mrb[0].mxu0
      %v1181 = vpop.f32.mrb[0].mxu0
      %1182 = vdwg.mxu0
      %v1183 = vadd.f32 %v1137, %v1178
      %s1184 = scalar_lea.vmem %s246, 36
      %v1185 = vld [vmem:[%s1184] sm:$0x3]
      %v1187 = vsel %vm279, %v1185, 0
      %1189 = vmatprep.subr.bf16.mxu0 0
      %1190 = vmatpush1.bf16.msra.mxu0 %v771
      %1191 = vmatprep.subr.bf16.mxu0 0
      %1192 = vmatpush1.bf16.msra.mxu0 %v772
      %1193 = vmatprep.subr.bf16.mxu0 0
      %1194 = vmatpush1.bf16.msra.mxu0 0
      %1195 = vmatprep.subr.bf16.mxu0 0
      %1196 = vmatpush1.bf16.msra.mxu0 0
      %1197 = vmatprep.subr.bf16.mxu0 0
      %1198 = vmatpush1.bf16.msra.mxu0 0
      %1199 = vmatprep.subr.bf16.mxu0 0
      %1200 = vmatpush1.bf16.msra.mxu0 0
      %1201 = vmatprep.subr.bf16.mxu0 0
      %1202 = vmatpush1.bf16.msra.mxu0 0
      %1203 = vmatprep.subr.bf16.mxu0 0
      %1204 = vmatpush1.bf16.msra.mxu0 0
      %1205 = vmatprep.subr.bf16.mxu0 0
      %1206 = vmatpush1.bf16.msra.mxu0 0
      %1207 = vmatprep.subr.bf16.mxu0 0
      %1208 = vmatpush1.bf16.msra.mxu0 0
      %1209 = vmatprep.subr.bf16.mxu0 0
      %1210 = vmatpush1.bf16.msra.mxu0 0
      %1211 = vmatprep.subr.bf16.mxu0 0
      %1212 = vmatpush1.bf16.msra.mxu0 0
      %1213 = vmatprep.subr.bf16.mxu0 0
      %1214 = vmatpush1.bf16.msra.mxu0 0
      %1215 = vmatprep.subr.bf16.mxu0 0
      %1216 = vmatpush1.bf16.msra.mxu0 0
      %1217 = vmatprep.subr.bf16.mxu0 0
      %1218 = vmatpush1.bf16.msra.mxu0 0
      %1219 = vmatprep.subr.bf16.mxu0 0
      %1220 = vmatpush1.bf16.msra.mxu0 0
      %1221 = vmatprep.mubr.bf16.mxu0 0
      %1222 = vmatmul.mubr.bf16.gmra.mrb[0].mxu0 %v1187
      %v1223 = vpop.f32.mrb[0].mxu0
      %v1224 = vadd.f32 0.0, %v1223
      %v1225 = vpop.f32.mrb[0].mxu0
      %v1226 = vpop.f32.mrb[0].mxu0
      %v1227 = vpop.f32.mrb[0].mxu0
      %1228 = vdwg.mxu0
      %v1229 = vadd.f32 %v1183, %v1224
      %v1230 = vadd.f32 %v1229, %v824
      %v1231 = vmax.f32 %v1230, 0.0
      %v1232 = vpack.c.bf16 %v1231, %v1231
      %s1233 = scalar_lea.vmem %s3, 16
      %v1234 = vld [vmem:[%s1233] sm:$0xf]
      %v1235 = vld [vmem:[%s1233 + $0x4] sm:$0xf]
      %v1236 = vld [vmem:[%s1233 + $0x8] sm:$0xf]
      %v1237 = vld [vmem:[%s1233 + $0xc] sm:$0xf]
      %v1242 = vunpack.c.l.b16 %v1234
      %v1243 = vunpack.c.l.b16 %v1235
      %v1244 = vunpack.c.l.b16 %v1236
      %v1245 = vunpack.c.l.b16 %v1237
      %v1246 = vpack.c.b16 %v1243, %v1242
      %v1247 = vpack.c.b16 %v1245, %v1244
      %v1251 = vsel %vm279, %v1232, 0
      %1253 = vmatprep.subr.bf16.mxu0 0
      %1254 = vmatpush1.bf16.msra.mxu0 %v1246
      %1255 = vmatprep.subr.bf16.mxu0 0
      %1256 = vmatpush1.bf16.msra.mxu0 %v1247
      %1257 = vmatprep.subr.bf16.mxu0 0
      %1258 = vmatpush1.bf16.msra.mxu0 0
      %1259 = vmatprep.subr.bf16.mxu0 0
      %1260 = vmatpush1.bf16.msra.mxu0 0
      %1261 = vmatprep.subr.bf16.mxu0 0
      %1262 = vmatpush1.bf16.msra.mxu0 0
      %1263 = vmatprep.subr.bf16.mxu0 0
      %1264 = vmatpush1.bf16.msra.mxu0 0
      %1265 = vmatprep.subr.bf16.mxu0 0
      %1266 = vmatpush1.bf16.msra.mxu0 0
      %1267 = vmatprep.subr.bf16.mxu0 0
      %1268 = vmatpush1.bf16.msra.mxu0 0
      %1269 = vmatprep.subr.bf16.mxu0 0
      %1270 = vmatpush1.bf16.msra.mxu0 0
      %1271 = vmatprep.subr.bf16.mxu0 0
      %1272 = vmatpush1.bf16.msra.mxu0 0
      %1273 = vmatprep.subr.bf16.mxu0 0
      %1274 = vmatpush1.bf16.msra.mxu0 0
      %1275 = vmatprep.subr.bf16.mxu0 0
      %1276 = vmatpush1.bf16.msra.mxu0 0
      %1277 = vmatprep.subr.bf16.mxu0 0
      %1278 = vmatpush1.bf16.msra.mxu0 0
      %1279 = vmatprep.subr.bf16.mxu0 0
      %1280 = vmatpush1.bf16.msra.mxu0 0
      %1281 = vmatprep.subr.bf16.mxu0 0
      %1282 = vmatpush1.bf16.msra.mxu0 0
      %1283 = vmatprep.subr.bf16.mxu0 0
      %1284 = vmatpush1.bf16.msra.mxu0 0
      %1285 = vmatprep.mubr.bf16.mxu0 0
      %1286 = vmatmul.mubr.bf16.gmra.mrb[0].mxu0 %v1251
      %v1287 = vpop.f32.mrb[0].mxu0
      %v1288 = vadd.f32 0.0, %v1287
      %v1289 = vpop.f32.mrb[0].mxu0
      %v1290 = vpop.f32.mrb[0].mxu0
      %v1291 = vpop.f32.mrb[0].mxu0
      %1292 = vdwg.mxu0
      %v1297 = vunpack.c.l.b16 %v829
      %v1298 = vunpack.c.l.b16 %v830
      %v1299 = vunpack.c.l.b16 %v831
      %v1300 = vunpack.c.l.b16 %v832
      %v1301 = vpack.c.b16 %v1298, %v1297
      %v1302 = vpack.c.b16 %v1300, %v1299
      %v1306 = vsel %vm279, %v828, 0
      %1308 = vmatprep.subr.bf16.mxu0 0
      %1309 = vmatpush1.bf16.msra.mxu0 %v1301
      %1310 = vmatprep.subr.bf16.mxu0 0
      %1311 = vmatpush1.bf16.msra.mxu0 %v1302
      %1312 = vmatprep.subr.bf16.mxu0 0
      %1313 = vmatpush1.bf16.msra.mxu0 0
      %1314 = vmatprep.subr.bf16.mxu0 0
      %1315 = vmatpush1.bf16.msra.mxu0 0
      %1316 = vmatprep.subr.bf16.mxu0 0
      %1317 = vmatpush1.bf16.msra.mxu0 0
      %1318 = vmatprep.subr.bf16.mxu0 0
      %1319 = vmatpush1.bf16.msra.mxu0 0
      %1320 = vmatprep.subr.bf16.mxu0 0
      %1321 = vmatpush1.bf16.msra.mxu0 0
      %1322 = vmatprep.subr.bf16.mxu0 0
      %1323 = vmatpush1.bf16.msra.mxu0 0
      %1324 = vmatprep.subr.bf16.mxu0 0
      %1325 = vmatpush1.bf16.msra.mxu0 0
      %1326 = vmatprep.subr.bf16.mxu0 0
      %1327 = vmatpush1.bf16.msra.mxu0 0
      %1328 = vmatprep.subr.bf16.mxu0 0
      %1329 = vmatpush1.bf16.msra.mxu0 0
      %1330 = vmatprep.subr.bf16.mxu0 0
      %1331 = vmatpush1.bf16.msra.mxu0 0
      %1332 = vmatprep.subr.bf16.mxu0 0
      %1333 = vmatpush1.bf16.msra.mxu0 0
      %1334 = vmatprep.subr.bf16.mxu0 0
      %1335 = vmatpush1.bf16.msra.mxu0 0
      %1336 = vmatprep.subr.bf16.mxu0 0
      %1337 = vmatpush1.bf16.msra.mxu0 0
      %1338 = vmatprep.subr.bf16.mxu0 0
      %1339 = vmatpush1.bf16.msra.mxu0 0
      %1340 = vmatprep.mubr.bf16.mxu0 0
      %1341 = vmatmul.mubr.bf16.gmra.mrb[0].mxu0 %v1306
      %v1342 = vpop.f32.mrb[0].mxu0
      %v1343 = vadd.f32 %v1288, %v1342
      %v1344 = vpop.f32.mrb[0].mxu0
      %v1345 = vpop.f32.mrb[0].mxu0
      %v1346 = vpop.f32.mrb[0].mxu0
      %1347 = vdwg.mxu0
      %s1348 = scalar_lea.vmem %s246, 12
      %v1349 = vld [vmem:[%s1348] sm:$0x3]
      %v1351 = vsel %vm279, %v1349, 0
      %1353 = vmatprep.subr.bf16.mxu0 0
      %1354 = vmatpush1.bf16.msra.mxu0 %v275
      %1355 = vmatprep.subr.bf16.mxu0 0
      %1356 = vmatpush1.bf16.msra.mxu0 %v276
      %1357 = vmatprep.subr.bf16.mxu0 0
      %1358 = vmatpush1.bf16.msra.mxu0 0
      %1359 = vmatprep.subr.bf16.mxu0 0
      %1360 = vmatpush1.bf16.msra.mxu0 0
      %1361 = vmatprep.subr.bf16.mxu0 0
      %1362 = vmatpush1.bf16.msra.mxu0 0
      %1363 = vmatprep.subr.bf16.mxu0 0
      %1364 = vmatpush1.bf16.msra.mxu0 0
      %1365 = vmatprep.subr.bf16.mxu0 0
      %1366 = vmatpush1.bf16.msra.mxu0 0
      %1367 = vmatprep.subr.bf16.mxu0 0
      %1368 = vmatpush1.bf16.msra.mxu0 0
      %1369 = vmatprep.subr.bf16.mxu0 0
      %1370 = vmatpush1.bf16.msra.mxu0 0
      %1371 = vmatprep.subr.bf16.mxu0 0
      %1372 = vmatpush1.bf16.msra.mxu0 0
      %1373 = vmatprep.subr.bf16.mxu0 0
      %1374 = vmatpush1.bf16.msra.mxu0 0
      %1375 = vmatprep.subr.bf16.mxu0 0
      %1376 = vmatpush1.bf16.msra.mxu0 0
      %1377 = vmatprep.subr.bf16.mxu0 0
      %1378 = vmatpush1.bf16.msra.mxu0 0
      %1379 = vmatprep.subr.bf16.mxu0 0
      %1380 = vmatpush1.bf16.msra.mxu0 0
      %1381 = vmatprep.subr.bf16.mxu0 0
      %1382 = vmatpush1.bf16.msra.mxu0 0
      %1383 = vmatprep.subr.bf16.mxu0 0
      %1384 = vmatpush1.bf16.msra.mxu0 0
      %1385 = vmatprep.mubr.bf16.mxu0 0
      %1386 = vmatmul.mubr.bf16.gmra.mrb[0].mxu0 %v1351
      %v1387 = vpop.f32.mrb[0].mxu0
      %v1388 = vadd.f32 0.0, %v1387
      %v1389 = vpop.f32.mrb[0].mxu0
      %v1390 = vpop.f32.mrb[0].mxu0
      %v1391 = vpop.f32.mrb[0].mxu0
      %1392 = vdwg.mxu0
      %1393 = vmatprep.subr.bf16.mxu0 0
      %1394 = vmatpush1.bf16.msra.mxu0 %v331
      %1395 = vmatprep.subr.bf16.mxu0 0
      %1396 = vmatpush1.bf16.msra.mxu0 %v332
      %1397 = vmatprep.subr.bf16.mxu0 0
      %1398 = vmatpush1.bf16.msra.mxu0 0
      %1399 = vmatprep.subr.bf16.mxu0 0
      %1400 = vmatpush1.bf16.msra.mxu0 0
      %1401 = vmatprep.subr.bf16.mxu0 0
      %1402 = vmatpush1.bf16.msra.mxu0 0
      %1403 = vmatprep.subr.bf16.mxu0 0
      %1404 = vmatpush1.bf16.msra.mxu0 0
      %1405 = vmatprep.subr.bf16.mxu0 0
      %1406 = vmatpush1.bf16.msra.mxu0 0
      %1407 = vmatprep.subr.bf16.mxu0 0
      %1408 = vmatpush1.bf16.msra.mxu0 0
      %1409 = vmatprep.subr.bf16.mxu0 0
      %1410 = vmatpush1.bf16.msra.mxu0 0
      %1411 = vmatprep.subr.bf16.mxu0 0
      %1412 = vmatpush1.bf16.msra.mxu0 0
      %1413 = vmatprep.subr.bf16.mxu0 0
      %1414 = vmatpush1.bf16.msra.mxu0 0
      %1415 = vmatprep.subr.bf16.mxu0 0
      %1416 = vmatpush1.bf16.msra.mxu0 0
      %1417 = vmatprep.subr.bf16.mxu0 0
      %1418 = vmatpush1.bf16.msra.mxu0 0
      %1419 = vmatprep.subr.bf16.mxu0 0
      %1420 = vmatpush1.bf16.msra.mxu0 0
      %1421 = vmatprep.subr.bf16.mxu0 0
      %1422 = vmatpush1.bf16.msra.mxu0 0
      %1423 = vmatprep.subr.bf16.mxu0 0
      %1424 = vmatpush1.bf16.msra.mxu0 0
      %1425 = vmatprep.mubr.bf16.mxu0 0
      %1426 = vmatmul.mubr.bf16.gmra.mrb[0].mxu0 %v921
      %v1427 = vpop.f32.mrb[0].mxu0
      %v1428 = vadd.f32 %v1388, %v1427
      %v1429 = vpop.f32.mrb[0].mxu0
      %v1430 = vpop.f32.mrb[0].mxu0
      %v1431 = vpop.f32.mrb[0].mxu0
      %1432 = vdwg.mxu0
      %s1433 = scalar_lea.vmem %s246, 6
      %v1434 = vld [vmem:[%s1433] sm:$0x3]
      %v1436 = vsel %vm279, %v1434, 0
      %1438 = vmatprep.subr.bf16.mxu0 0
      %1439 = vmatpush1.bf16.msra.mxu0 %v393
      %1440 = vmatprep.subr.bf16.mxu0 0
      %1441 = vmatpush1.bf16.msra.mxu0 %v394
      %1442 = vmatprep.subr.bf16.mxu0 0
      %1443 = vmatpush1.bf16.msra.mxu0 0
      %1444 = vmatprep.subr.bf16.mxu0 0
      %1445 = vmatpush1.bf16.msra.mxu0 0
      %1446 = vmatprep.subr.bf16.mxu0 0
      %1447 = vmatpush1.bf16.msra.mxu0 0
      %1448 = vmatprep.subr.bf16.mxu0 0
      %1449 = vmatpush1.bf16.msra.mxu0 0
      %1450 = vmatprep.subr.bf16.mxu0 0
      %1451 = vmatpush1.bf16.msra.mxu0 0
      %1452 = vmatprep.subr.bf16.mxu0 0
      %1453 = vmatpush1.bf16.msra.mxu0 0
      %1454 = vmatprep.subr.bf16.mxu0 0
      %1455 = vmatpush1.bf16.msra.mxu0 0
      %1456 = vmatprep.subr.bf16.mxu0 0
      %1457 = vmatpush1.bf16.msra.mxu0 0
      %1458 = vmatprep.subr.bf16.mxu0 0
      %1459 = vmatpush1.bf16.msra.mxu0 0
      %1460 = vmatprep.subr.bf16.mxu0 0
      %1461 = vmatpush1.bf16.msra.mxu0 0
      %1462 = vmatprep.subr.bf16.mxu0 0
      %1463 = vmatpush1.bf16.msra.mxu0 0
      %1464 = vmatprep.subr.bf16.mxu0 0
      %1465 = vmatpush1.bf16.msra.mxu0 0
      %1466 = vmatprep.subr.bf16.mxu0 0
      %1467 = vmatpush1.bf16.msra.mxu0 0
      %1468 = vmatprep.subr.bf16.mxu0 0
      %1469 = vmatpush1.bf16.msra.mxu0 0
      %1470 = vmatprep.mubr.bf16.mxu0 0
      %1471 = vmatmul.mubr.bf16.gmra.mrb[0].mxu0 %v1436
      %v1472 = vpop.f32.mrb[0].mxu0
      %v1473 = vadd.f32 0.0, %v1472
      %v1474 = vpop.f32.mrb[0].mxu0
      %v1475 = vpop.f32.mrb[0].mxu0
      %v1476 = vpop.f32.mrb[0].mxu0
      %1477 = vdwg.mxu0
      %v1478 = vadd.f32 %v1428, %v1473
      %1479 = vmatprep.subr.bf16.mxu0 0
      %1480 = vmatpush1.bf16.msra.mxu0 %v456
      %1481 = vmatprep.subr.bf16.mxu0 0
      %1482 = vmatpush1.bf16.msra.mxu0 %v457
      %1483 = vmatprep.subr.bf16.mxu0 0
      %1484 = vmatpush1.bf16.msra.mxu0 0
      %1485 = vmatprep.subr.bf16.mxu0 0
      %1486 = vmatpush1.bf16.msra.mxu0 0
      %1487 = vmatprep.subr.bf16.mxu0 0
      %1488 = vmatpush1.bf16.msra.mxu0 0
      %1489 = vmatprep.subr.bf16.mxu0 0
      %1490 = vmatpush1.bf16.msra.mxu0 0
      %1491 = vmatprep.subr.bf16.mxu0 0
      %1492 = vmatpush1.bf16.msra.mxu0 0
      %1493 = vmatprep.subr.bf16.mxu0 0
      %1494 = vmatpush1.bf16.msra.mxu0 0
      %1495 = vmatprep.subr.bf16.mxu0 0
      %1496 = vmatpush1.bf16.msra.mxu0 0
      %1497 = vmatprep.subr.bf16.mxu0 0
      %1498 = vmatpush1.bf16.msra.mxu0 0
      %1499 = vmatprep.subr.bf16.mxu0 0
      %1500 = vmatpush1.bf16.msra.mxu0 0
      %1501 = vmatprep.subr.bf16.mxu0 0
      %1502 = vmatpush1.bf16.msra.mxu0 0
      %1503 = vmatprep.subr.bf16.mxu0 0
      %1504 = vmatpush1.bf16.msra.mxu0 0
      %1505 = vmatprep.subr.bf16.mxu0 0
      %1506 = vmatpush1.bf16.msra.mxu0 0
      %1507 = vmatprep.subr.bf16.mxu0 0
      %1508 = vmatpush1.bf16.msra.mxu0 0
      %1509 = vmatprep.subr.bf16.mxu0 0
      %1510 = vmatpush1.bf16.msra.mxu0 0
      %1511 = vmatprep.mubr.bf16.mxu0 0
      %1512 = vmatmul.mubr.bf16.gmra.mrb[0].mxu0 %v1054
      %v1513 = vpop.f32.mrb[0].mxu0
      %v1514 = vadd.f32 0.0, %v1513
      %v1515 = vpop.f32.mrb[0].mxu0
      %v1516 = vpop.f32.mrb[0].mxu0
      %v1517 = vpop.f32.mrb[0].mxu0
      %1518 = vdwg.mxu0
      %v1519 = vadd.f32 %v1478, %v1514
      %s1520 = scalar_lea.vmem %s246, 28
      %v1521 = vld [vmem:[%s1520] sm:$0x3]
      %v1523 = vsel %vm279, %v1521, 0
      %1525 = vmatprep.subr.bf16.mxu0 0
      %1526 = vmatpush1.bf16.msra.mxu0 %v519
      %1527 = vmatprep.subr.bf16.mxu0 0
      %1528 = vmatpush1.bf16.msra.mxu0 %v520
      %1529 = vmatprep.subr.bf16.mxu0 0
      %1530 = vmatpush1.bf16.msra.mxu0 0
      %1531 = vmatprep.subr.bf16.mxu0 0
      %1532 = vmatpush1.bf16.msra.mxu0 0
      %1533 = vmatprep.subr.bf16.mxu0 0
      %1534 = vmatpush1.bf16.msra.mxu0 0
      %1535 = vmatprep.subr.bf16.mxu0 0
      %1536 = vmatpush1.bf16.msra.mxu0 0
      %1537 = vmatprep.subr.bf16.mxu0 0
      %1538 = vmatpush1.bf16.msra.mxu0 0
      %1539 = vmatprep.subr.bf16.mxu0 0
      %1540 = vmatpush1.bf16.msra.mxu0 0
      %1541 = vmatprep.subr.bf16.mxu0 0
      %1542 = vmatpush1.bf16.msra.mxu0 0
      %1543 = vmatprep.subr.bf16.mxu0 0
      %1544 = vmatpush1.bf16.msra.mxu0 0
      %1545 = vmatprep.subr.bf16.mxu0 0
      %1546 = vmatpush1.bf16.msra.mxu0 0
      %1547 = vmatprep.subr.bf16.mxu0 0
      %1548 = vmatpush1.bf16.msra.mxu0 0
      %1549 = vmatprep.subr.bf16.mxu0 0
      %1550 = vmatpush1.bf16.msra.mxu0 0
      %1551 = vmatprep.subr.bf16.mxu0 0
      %1552 = vmatpush1.bf16.msra.mxu0 0
      %1553 = vmatprep.subr.bf16.mxu0 0
      %1554 = vmatpush1.bf16.msra.mxu0 0
      %1555 = vmatprep.subr.bf16.mxu0 0
      %1556 = vmatpush1.bf16.msra.mxu0 0
      %1557 = vmatprep.mubr.bf16.mxu0 0
      %1558 = vmatmul.mubr.bf16.gmra.mrb[0].mxu0 %v1523
      %v1559 = vpop.f32.mrb[0].mxu0
      %v1560 = vadd.f32 0.0, %v1559
      %v1561 = vpop.f32.mrb[0].mxu0
      %v1562 = vpop.f32.mrb[0].mxu0
      %v1563 = vpop.f32.mrb[0].mxu0
      %1564 = vdwg.mxu0
      %v1565 = vadd.f32 %v1519, %v1560
      %s1566 = scalar_lea.vmem %s246, 22
      %v1567 = vld [vmem:[%s1566] sm:$0x3]
      %v1569 = vsel %vm279, %v1567, 0
      %1571 = vmatprep.subr.bf16.mxu0 0
      %1572 = vmatpush1.bf16.msra.mxu0 %v582
      %1573 = vmatprep.subr.bf16.mxu0 0
      %1574 = vmatpush1.bf16.msra.mxu0 %v583
      %1575 = vmatprep.subr.bf16.mxu0 0
      %1576 = vmatpush1.bf16.msra.mxu0 0
      %1577 = vmatprep.subr.bf16.mxu0 0
      %1578 = vmatpush1.bf16.msra.mxu0 0
      %1579 = vmatprep.subr.bf16.mxu0 0
      %1580 = vmatpush1.bf16.msra.mxu0 0
      %1581 = vmatprep.subr.bf16.mxu0 0
      %1582 = vmatpush1.bf16.msra.mxu0 0
      %1583 = vmatprep.subr.bf16.mxu0 0
      %1584 = vmatpush1.bf16.msra.mxu0 0
      %1585 = vmatprep.subr.bf16.mxu0 0
      %1586 = vmatpush1.bf16.msra.mxu0 0
      %1587 = vmatprep.subr.bf16.mxu0 0
      %1588 = vmatpush1.bf16.msra.mxu0 0
      %1589 = vmatprep.subr.bf16.mxu0 0
      %1590 = vmatpush1.bf16.msra.mxu0 0
      %1591 = vmatprep.subr.bf16.mxu0 0
      %1592 = vmatpush1.bf16.msra.mxu0 0
      %1593 = vmatprep.subr.bf16.mxu0 0
      %1594 = vmatpush1.bf16.msra.mxu0 0
      %1595 = vmatprep.subr.bf16.mxu0 0
      %1596 = vmatpush1.bf16.msra.mxu0 0
      %1597 = vmatprep.subr.bf16.mxu0 0
      %1598 = vmatpush1.bf16.msra.mxu0 0
      %1599 = vmatprep.subr.bf16.mxu0 0
      %1600 = vmatpush1.bf16.msra.mxu0 0
      %1601 = vmatprep.subr.bf16.mxu0 0
      %1602 = vmatpush1.bf16.msra.mxu0 0
      %1603 = vmatprep.mubr.bf16.mxu0 0
      %1604 = vmatmul.mubr.bf16.gmra.mrb[0].mxu0 %v1569
      %v1605 = vpop.f32.mrb[0].mxu0
      %v1606 = vadd.f32 0.0, %v1605
      %v1607 = vpop.f32.mrb[0].mxu0
      %v1608 = vpop.f32.mrb[0].mxu0
      %v1609 = vpop.f32.mrb[0].mxu0
      %1610 = vdwg.mxu0
      %v1611 = vadd.f32 %v1565, %v1606
      %1612 = vmatprep.subr.bf16.mxu0 0
      %1613 = vmatpush1.bf16.msra.mxu0 %v645
      %1614 = vmatprep.subr.bf16.mxu0 0
      %1615 = vmatpush1.bf16.msra.mxu0 %v646
      %1616 = vmatprep.subr.bf16.mxu0 0
      %1617 = vmatpush1.bf16.msra.mxu0 0
      %1618 = vmatprep.subr.bf16.mxu0 0
      %1619 = vmatpush1.bf16.msra.mxu0 0
      %1620 = vmatprep.subr.bf16.mxu0 0
      %1621 = vmatpush1.bf16.msra.mxu0 0
      %1622 = vmatprep.subr.bf16.mxu0 0
      %1623 = vmatpush1.bf16.msra.mxu0 0
      %1624 = vmatprep.subr.bf16.mxu0 0
      %1625 = vmatpush1.bf16.msra.mxu0 0
      %1626 = vmatprep.subr.bf16.mxu0 0
      %1627 = vmatpush1.bf16.msra.mxu0 0
      %1628 = vmatprep.subr.bf16.mxu0 0
      %1629 = vmatpush1.bf16.msra.mxu0 0
      %1630 = vmatprep.subr.bf16.mxu0 0
      %1631 = vmatpush1.bf16.msra.mxu0 0
      %1632 = vmatprep.subr.bf16.mxu0 0
      %1633 = vmatpush1.bf16.msra.mxu0 0
      %1634 = vmatprep.subr.bf16.mxu0 0
      %1635 = vmatpush1.bf16.msra.mxu0 0
      %1636 = vmatprep.subr.bf16.mxu0 0
      %1637 = vmatpush1.bf16.msra.mxu0 0
      %1638 = vmatprep.subr.bf16.mxu0 0
      %1639 = vmatpush1.bf16.msra.mxu0 0
      %1640 = vmatprep.subr.bf16.mxu0 0
      %1641 = vmatpush1.bf16.msra.mxu0 0
      %1642 = vmatprep.subr.bf16.mxu0 0
      %1643 = vmatpush1.bf16.msra.mxu0 0
      %1644 = vmatprep.mubr.bf16.mxu0 0
      %1645 = vmatmul.mubr.bf16.gmra.mrb[0].mxu0 %v1187
      %v1646 = vpop.f32.mrb[0].mxu0
      %v1647 = vadd.f32 0.0, %v1646
      %v1648 = vpop.f32.mrb[0].mxu0
      %v1649 = vpop.f32.mrb[0].mxu0
      %v1650 = vpop.f32.mrb[0].mxu0
      %1651 = vdwg.mxu0
      %v1652 = vadd.f32 %v1611, %v1647
      %s1653 = scalar_lea.vmem %s246, 44
      %v1654 = vld [vmem:[%s1653] sm:$0x3]
      %v1656 = vsel %vm279, %v1654, 0
      %1658 = vmatprep.subr.bf16.mxu0 0
      %1659 = vmatpush1.bf16.msra.mxu0 %v708
      %1660 = vmatprep.subr.bf16.mxu0 0
      %1661 = vmatpush1.bf16.msra.mxu0 %v709
      %1662 = vmatprep.subr.bf16.mxu0 0
      %1663 = vmatpush1.bf16.msra.mxu0 0
      %1664 = vmatprep.subr.bf16.mxu0 0
      %1665 = vmatpush1.bf16.msra.mxu0 0
      %1666 = vmatprep.subr.bf16.mxu0 0
      %1667 = vmatpush1.bf16.msra.mxu0 0
      %1668 = vmatprep.subr.bf16.mxu0 0
      %1669 = vmatpush1.bf16.msra.mxu0 0
      %1670 = vmatprep.subr.bf16.mxu0 0
      %1671 = vmatpush1.bf16.msra.mxu0 0
      %1672 = vmatprep.subr.bf16.mxu0 0
      %1673 = vmatpush1.bf16.msra.mxu0 0
      %1674 = vmatprep.subr.bf16.mxu0 0
      %1675 = vmatpush1.bf16.msra.mxu0 0
      %1676 = vmatprep.subr.bf16.mxu0 0
      %1677 = vmatpush1.bf16.msra.mxu0 0
      %1678 = vmatprep.subr.bf16.mxu0 0
      %1679 = vmatpush1.bf16.msra.mxu0 0
      %1680 = vmatprep.subr.bf16.mxu0 0
      %1681 = vmatpush1.bf16.msra.mxu0 0
      %1682 = vmatprep.subr.bf16.mxu0 0
      %1683 = vmatpush1.bf16.msra.mxu0 0
      %1684 = vmatprep.subr.bf16.mxu0 0
      %1685 = vmatpush1.bf16.msra.mxu0 0
      %1686 = vmatprep.subr.bf16.mxu0 0
      %1687 = vmatpush1.bf16.msra.mxu0 0
      %1688 = vmatprep.subr.bf16.mxu0 0
      %1689 = vmatpush1.bf16.msra.mxu0 0
      %1690 = vmatprep.mubr.bf16.mxu0 0
      %1691 = vmatmul.mubr.bf16.gmra.mrb[0].mxu0 %v1656
      %v1692 = vpop.f32.mrb[0].mxu0
      %v1693 = vadd.f32 0.0, %v1692
      %v1694 = vpop.f32.mrb[0].mxu0
      %v1695 = vpop.f32.mrb[0].mxu0
      %v1696 = vpop.f32.mrb[0].mxu0
      %1697 = vdwg.mxu0
      %v1698 = vadd.f32 %v1652, %v1693
      %s1699 = scalar_lea.vmem %s246, 38
      %v1700 = vld [vmem:[%s1699] sm:$0x3]
      %v1702 = vsel %vm279, %v1700, 0
      %1704 = vmatprep.subr.bf16.mxu0 0
      %1705 = vmatpush1.bf16.msra.mxu0 %v771
      %1706 = vmatprep.subr.bf16.mxu0 0
      %1707 = vmatpush1.bf16.msra.mxu0 %v772
      %1708 = vmatprep.subr.bf16.mxu0 0
      %1709 = vmatpush1.bf16.msra.mxu0 0
      %1710 = vmatprep.subr.bf16.mxu0 0
      %1711 = vmatpush1.bf16.msra.mxu0 0
      %1712 = vmatprep.subr.bf16.mxu0 0
      %1713 = vmatpush1.bf16.msra.mxu0 0
      %1714 = vmatprep.subr.bf16.mxu0 0
      %1715 = vmatpush1.bf16.msra.mxu0 0
      %1716 = vmatprep.subr.bf16.mxu0 0
      %1717 = vmatpush1.bf16.msra.mxu0 0
      %1718 = vmatprep.subr.bf16.mxu0 0
      %1719 = vmatpush1.bf16.msra.mxu0 0
      %1720 = vmatprep.subr.bf16.mxu0 0
      %1721 = vmatpush1.bf16.msra.mxu0 0
      %1722 = vmatprep.subr.bf16.mxu0 0
      %1723 = vmatpush1.bf16.msra.mxu0 0
      %1724 = vmatprep.subr.bf16.mxu0 0
      %1725 = vmatpush1.bf16.msra.mxu0 0
      %1726 = vmatprep.subr.bf16.mxu0 0
      %1727 = vmatpush1.bf16.msra.mxu0 0
      %1728 = vmatprep.subr.bf16.mxu0 0
      %1729 = vmatpush1.bf16.msra.mxu0 0
      %1730 = vmatprep.subr.bf16.mxu0 0
      %1731 = vmatpush1.bf16.msra.mxu0 0
      %1732 = vmatprep.subr.bf16.mxu0 0
      %1733 = vmatpush1.bf16.msra.mxu0 0
      %1734 = vmatprep.subr.bf16.mxu0 0
      %1735 = vmatpush1.bf16.msra.mxu0 0
      %1736 = vmatprep.mubr.bf16.mxu0 0
      %1737 = vmatmul.mubr.bf16.gmra.mrb[0].mxu0 %v1702
      %v1738 = vpop.f32.mrb[0].mxu0
      %v1739 = vadd.f32 0.0, %v1738
      %v1740 = vpop.f32.mrb[0].mxu0
      %v1741 = vpop.f32.mrb[0].mxu0
      %v1742 = vpop.f32.mrb[0].mxu0
      %1743 = vdwg.mxu0
      %v1744 = vadd.f32 %v1698, %v1739
      %v1745 = vadd.f32 %v1744, %v824
      %v1746 = vmax.f32 %v1745, 0.0
      %v1747 = vpack.c.bf16 %v1746, %v1746
      %s1748 = scalar_lea.vmem %s3, 32
      %v1749 = vld [vmem:[%s1748] sm:$0xf]
      %v1750 = vld [vmem:[%s1748 + $0x4] sm:$0xf]
      %v1751 = vld [vmem:[%s1748 + $0x8] sm:$0xf]
      %v1752 = vld [vmem:[%s1748 + $0xc] sm:$0xf]
      %v1757 = vunpack.c.l.b16 %v1749
      %v1758 = vunpack.c.l.b16 %v1750
      %v1759 = vunpack.c.l.b16 %v1751
      %v1760 = vunpack.c.l.b16 %v1752
      %v1761 = vpack.c.b16 %v1758, %v1757
      %v1762 = vpack.c.b16 %v1760, %v1759
      %v1766 = vsel %vm279, %v1747, 0
      %1768 = vmatprep.subr.bf16.mxu0 0
      %1769 = vmatpush1.bf16.msra.mxu0 %v1761
      %1770 = vmatprep.subr.bf16.mxu0 0
      %1771 = vmatpush1.bf16.msra.mxu0 %v1762
      %1772 = vmatprep.subr.bf16.mxu0 0
      %1773 = vmatpush1.bf16.msra.mxu0 0
      %1774 = vmatprep.subr.bf16.mxu0 0
      %1775 = vmatpush1.bf16.msra.mxu0 0
      %1776 = vmatprep.subr.bf16.mxu0 0
      %1777 = vmatpush1.bf16.msra.mxu0 0
      %1778 = vmatprep.subr.bf16.mxu0 0
      %1779 = vmatpush1.bf16.msra.mxu0 0
      %1780 = vmatprep.subr.bf16.mxu0 0
      %1781 = vmatpush1.bf16.msra.mxu0 0
      %1782 = vmatprep.subr.bf16.mxu0 0
      %1783 = vmatpush1.bf16.msra.mxu0 0
      %1784 = vmatprep.subr.bf16.mxu0 0
      %1785 = vmatpush1.bf16.msra.mxu0 0
      %1786 = vmatprep.subr.bf16.mxu0 0
      %1787 = vmatpush1.bf16.msra.mxu0 0
      %1788 = vmatprep.subr.bf16.mxu0 0
      %1789 = vmatpush1.bf16.msra.mxu0 0
      %1790 = vmatprep.subr.bf16.mxu0 0
      %1791 = vmatpush1.bf16.msra.mxu0 0
      %1792 = vmatprep.subr.bf16.mxu0 0
      %1793 = vmatpush1.bf16.msra.mxu0 0
      %1794 = vmatprep.subr.bf16.mxu0 0
      %1795 = vmatpush1.bf16.msra.mxu0 0
      %1796 = vmatprep.subr.bf16.mxu0 0
      %1797 = vmatpush1.bf16.msra.mxu0 0
      %1798 = vmatprep.subr.bf16.mxu0 0
      %1799 = vmatpush1.bf16.msra.mxu0 0
      %1800 = vmatprep.mubr.bf16.mxu0 0
      %1801 = vmatmul.mubr.bf16.gmra.mrb[0].mxu0 %v1766
      %v1802 = vpop.f32.mrb[0].mxu0
      %v1803 = vadd.f32 0.0, %v1802
      %v1804 = vpop.f32.mrb[0].mxu0
      %v1805 = vpop.f32.mrb[0].mxu0
      %v1806 = vpop.f32.mrb[0].mxu0
      %1807 = vdwg.mxu0
      %v1808 = vadd.f32 %v1343, %v1803
      %v1809 = vld [vmem:[%s4] sm:$0x1]
      %v1811 = vlaneseq
      %v1812 = vshrl.u32 %v1811, 7
      %v1813 = vsub.s32 0, %v1812
      %v1814 = vrot.slane %v1809, %v1813
      %v1816 = vadd.f32 %v1808, %v1814
      %vm1817 = vcmask 256000
      %1818 = vst.msk [vmem:[%s253] sm:$0x7] %vm1817, %v1816
      %p1819 = scmp.lt.s32.totalorder %s20, 1
      %s1820 = scalar_select %p1819, %s20, 1
      %p1821 = scmp.lt.s32.totalorder %s21, 0
      %s1822 = scalar_select %p1821, %s21, 0
      %s1823 = sadd.s32 %s1822, %s1820
      %s1824 = smul.addr %s1823, 4
      %s1825 = scalar_lea.vmem %s5, %s1824
      // Predicated region
      $region41: #{subsampling_forward.3} parent=39 // pred_check
        %p1826 = pneg %p160
      $region42: #{subsampling_forward.3} parent=39 // pred_check_branch
        %1828 = sbr.rel (%p1826) target = $region44
      $region43: #{subsampling_forward.3} parent=39 // pred_region
        _
      $region44: #{subsampling_forward.3} parent=39 // pred_fallthru
        _
    $region40: #{subsampling_forward.3} parent=5 // pred_fallthru
      _
    %p1829 = scmp.le.s32.totalorder 2, %s11
    // Predicated region
    $region45: #{subsampling_forward.3} parent=5 // pred_check
      %p1830 = pneg %p1829
    $region46: #{subsampling_forward.3} parent=5 // pred_check_branch
      %1832 = sbr.rel (%p1830) target = $region48
    $region47: #{subsampling_forward.3} parent=5 // pred_region
      %s1833 = ssub.s32 %s11, 2
      // Predicated region
      $region49: #{subsampling_forward.3} parent=47 // pred_check
        %p1834 = pneg %p166
      $region50: #{subsampling_forward.3} parent=47 // pred_check_branch
        %1836 = sbr.rel (%p1834) target = $region52
      $region51: #{subsampling_forward.3} parent=47 // pred_region
        %p1837 = scmp.lt.s32.totalorder %s22, 1
        %s1838 = scalar_select %p1837, %s22, 1
        %p1839 = scmp.lt.s32.totalorder %s23, 0
        %s1840 = scalar_select %p1839, %s23, 0
        %s1841 = sadd.s32 %s1840, %s1838
        %s1842 = smul.addr %s1841, 4
        %s1843 = scalar_lea.vmem %s5, %s1842
      $region52: #{subsampling_forward.3} parent=47 // pred_fallthru
        _
    $region48: #{subsampling_forward.3} parent=5 // pred_fallthru
      _
  $region6: #{subsampling_forward.3} parent=0 // loop_footer
    %s15 = sadd.s32 1, %s11
  $region7: #{subsampling_forward.3} parent=0 // loop_footer_branch
    %10 = sbr.rel target = $region3
  $region8: #{subsampling_forward.3} parent=0 // loop_exit
    _

</llo_original>
